<compile_context>
chip_gen: v6e
topology: v6e:2x2x1
jax: 0.10.0
libtpu: 0.0.40
codegen_flags: <defaults>
</compile_context>

<pallas_src>
from functools import partial

import jax
import jax.numpy as jnp
from jax.experimental import pallas as pl
from jax.experimental.pallas import tpu as pltpu


_CONV_KS = (1, 3, 5, 3)        # Conv1d kernel sizes hard-coded by the module
_PAD = 2                       # max per-layer padding = (5 - 1) // 2

# packed-vector row indices (must match _pack_vectors ordering below)
(_R_C1B, _R_C2B, _R_C3B, _R_C4B,
 _R_P1B, _R_LN1G, _R_LN1B,
 _R_P2B, _R_LN2G, _R_LN2B,
 _R_P3B, _R_GW, _R_GB, _R_RB) = range(14)


def _gelu(v):
    c = 0.7978845608028654     # sqrt(2/pi); cubic factored to ease VALU pressure
    return 0.5 * v * (1.0 + jnp.tanh((c * v) * (1.0 + 0.044715 * (v * v))))


# ----------------------------------------------------------------------------- kernel

def _paf_kernel(x_ref, convw_ref, p1w_ref, p2w_ref, p3w_ref, rw_ref, vec_ref,
                out_ref, pad_ref):
    TB, Lb, D = x_ref.shape
    D2 = p1w_ref.shape[1]
    D4 = p2w_ref.shape[1]
    C = p3w_ref.shape[1]
    R = TB * Lb
    cdt = convw_ref.dtype                                  # bf16 compute dtype

    def vrow(r, width):                                    # (1, width) f32 slice
        return vec_ref[r:r + 1, :width]

    # Halo rows of the conv scratch must be zero. Re-zero them every step (cheap:
    # 2*PAD rows) so the kernel stays correct when the grid is split across cores.
    pad_ref[:, :_PAD, :] = jnp.zeros((TB, _PAD, D), cdt)
    pad_ref[:, _PAD + Lb:, :] = jnp.zeros((TB, _PAD, D), cdt)

    x = x_ref[...].reshape(R, D)                           # (R, D) f32 (residual src)
    x_c = x.astype(cdt)                                    # bf16 matmul operand

    # ---- conv stack: kernel sizes (1,3,5,3), GELU after each (dropout = identity).
    # Each conv = sum of tap-shifted (R, D) @ (D, D) MXU matmuls, f32 accumulation.
    tap0 = 0
    h_in = x_c                                             # bf16 input of current layer
    h = None                                               # f32 output of current layer
    for layer, K in enumerate(_CONV_KS):
        p = (K - 1) // 2
        if p > 0:
            # stage the layer input in the persistent zero-halo scratch
            pad_ref[:, _PAD:_PAD + Lb, :] = h_in.reshape(TB, Lb, D)
        acc = None
        for k in range(K):                                 # static unrolled tap loop
            if p == 0:
                lhs = h_in
            else:
                lhs = pad_ref[:, _PAD - p + k:_PAD - p + k + Lb, :].reshape(R, D)
            term = jnp.dot(lhs, convw_ref[tap0 + k],
                           preferred_element_type=jnp.float32)
            acc = term if acc is None else acc + term
        tap0 += K
        h = _gelu(acc + vrow(_R_C1B + layer, D))           # f32 (R, D)
        h_in = h.astype(cdt)

    def layernorm(v, grow, brow, width):
        mu = jnp.mean(v, axis=-1, keepdims=True)
        cen = v - mu
        var = jnp.mean(cen * cen, axis=-1, keepdims=True)
        return cen * jax.lax.rsqrt(var + 1e-5) * vrow(grow, width) + vrow(brow, width)

    # ---- projection MLP: Linear -> GELU -> LN -> Linear -> GELU -> LN -> Linear
    t = _gelu(jnp.dot(h_in, p1w_ref[...], preferred_element_type=jnp.float32)
              + vrow(_R_P1B, D2))
    t = layernorm(t, _R_LN1G, _R_LN1B, D2)
    t = _gelu(jnp.dot(t.astype(cdt), p2w_ref[...], preferred_element_type=jnp.float32)
              + vrow(_R_P2B, D4))
    t = layernorm(t, _R_LN2G, _R_LN2B, D4)
    proj = (jnp.dot(t.astype(cdt), p3w_ref[...], preferred_element_type=jnp.float32)
            + vrow(_R_P3B, C))                             # (R, C)

    # ---- residual branch from the ORIGINAL input
    res = (jnp.dot(x_c, rw_ref[...], preferred_element_type=jnp.float32)
           + vrow(_R_RB, C))                               # (R, C)

    # ---- gate: Linear(D,1)+sigmoid as VPU multiply + lane reduce; sigmoid via tanh
    glogit = jnp.sum(h * vrow(_R_GW, D), axis=-1, keepdims=True) + vrow(_R_GB, 1)
    gate = 0.5 * (1.0 + jnp.tanh(0.5 * glogit))            # == sigmoid(glogit)

    out = gate * proj + (1.0 - gate) * res                 # (R, C) f32
    out_ref[...] = out.reshape(TB, Lb, C).astype(out_ref.dtype)


# ----------------------------------------------------------------------------- weights

def _pack_vectors(vectors, width):
    rows = []
    for v in vectors:
        v = jnp.asarray(v, jnp.float32).reshape(-1)
        rows.append(jnp.pad(v, (0, width - v.shape[0])))
    while len(rows) % 8:
        rows.append(jnp.zeros((width,), jnp.float32))
    return jnp.stack(rows)                                 # (16, width) f32


def _kernel_weights(params, compute_dtype=jnp.bfloat16):
    """PyTorch-layout params -> kernel layout (pre-transposed, tap-stacked, packed)."""
    (conv_ws, conv_bs, p1w, p1b, ln1g, ln1b, p2w, p2b, ln2g, ln2b,
     p3w, p3b, gw, gb, rw, rb) = params
    d_model = p1w.shape[1]
    c_out = rw.shape[0]
    # Conv1d weight (D_out, D_in, K) -> tap-major (K, D_in, D_out); stack all taps.
    convw = jnp.concatenate([jnp.transpose(w, (2, 1, 0)) for w in conv_ws],
                            axis=0).astype(compute_dtype)              # (12, D, D)
    mats = (convw,
            p1w.T.astype(compute_dtype), p2w.T.astype(compute_dtype),
            p3w.T.astype(compute_dtype), rw.T.astype(compute_dtype))
    vec = _pack_vectors(
        [*conv_bs, p1b, ln1g, ln1b, p2b, ln2g, ln2b, p3b,
         gw.reshape(-1), gb, rb],
        width=max(d_model, c_out))
    return mats, vec


# ----------------------------------------------------------------------------- wrapper

def projection_attention_with_fft(x, params, *, compute_dtype=jnp.bfloat16,
                                  max_rows=512):
    """x: (B, L, d_model) batch-first, as in the PyTorch module. Returns (B, L, c_out)."""
    B, L, D = x.shape
    mats, vec = _kernel_weights(params, compute_dtype)
    convw, p1w, p2w, p3w, rw = mats
    C = rw.shape[1]

    # Fold as many batch elements per grid step as the row budget allows, so each
    # MXU matmul sees TB*L rows and the per-step overhead is amortized.
    TB = 1
    for d in range(1, B + 1):
        if B % d == 0 and d * L <= max(max_rows, L):
            TB = d

    def full_spec(w):
        nd = w.ndim
        return pl.BlockSpec(w.shape, lambda b, _nd=nd: (0,) * _nd)

    weights = (convw, p1w, p2w, p3w, rw, vec)
    out = pl.pallas_call(
        _paf_kernel,
        out_shape=jax.ShapeDtypeStruct((B, L, C), x.dtype),
        grid_spec=pltpu.PrefetchScalarGridSpec(
            num_scalar_prefetch=0,
            grid=(B // TB,),
            in_specs=[pl.BlockSpec((TB, L, D), lambda b: (b, 0, 0))]
                     + [full_spec(w) for w in weights],
            out_specs=pl.BlockSpec((TB, L, C), lambda b: (b, 0, 0)),
            scratch_shapes=[pltpu.VMEM((TB, L + 2 * _PAD, D), compute_dtype)],
        ),
        compiler_params=pltpu.CompilerParams(
            dimension_semantics=("parallel",),
            vmem_limit_bytes=48 * 1024 * 1024,
        ),
    )(x, *weights)
    return out


# ----------------------------------------------------------------------------- params

def init_params(key, d_model, c_out, scale=0.1):
    """Deterministic synthetic parameters in PyTorch layout."""
    ks = iter(jax.random.split(key, 24))

    def rnd(shape):
        return scale * jax.random.normal(next(ks), shape, jnp.float32)

    conv_ws = tuple(rnd((d_model, d_model, k)) for k in _CONV_KS)
    conv_bs = tuple(rnd((d_model,)) for _ in _CONV_KS)

    d2, d4 = d_model // 2, d_model // 4
    p1w, p1b = rnd((d2, d_model)), rnd((d2,))
    ln1g, ln1b = 1.0 + rnd((d2,)), rnd((d2,))
    p2w, p2b = rnd((d4, d2)), rnd((d4,))
    ln2g, ln2b = 1.0 + rnd((d4,)), rnd((d4,))
    p3w, p3b = rnd((c_out, d4)), rnd((c_out,))
    gw, gb = rnd((1, d_model)), rnd((1,))
    if d_model == c_out:                                   # nn.Identity() case
        rw = jnp.eye(d_model, dtype=jnp.float32)
        rb = jnp.zeros((c_out,), jnp.float32)
    else:
        rw, rb = rnd((c_out, d_model)), rnd((c_out,))
    return (conv_ws, conv_bs, p1w, p1b, ln1g, ln1b, p2w, p2b, ln2g, ln2b,
            p3w, p3b, gw, gb, rw, rb)


# ----------------------------------------------------------------------------- reference

def ref_forward(x, params):
    """Pure-JAX f32 reference reproducing the PyTorch forward (eval mode)."""
    (conv_ws, conv_bs, p1w, p1b, ln1g, ln1b, p2w, p2b, ln2g, ln2b,
     p3w, p3b, gw, gb, rw, rb) = params
    hp = jax.lax.Precision.HIGHEST

    y = x                                                  # (B, L, D)
    h = jnp.transpose(x, (0, 2, 1))                        # (B, D, L)
    for w, b in zip(conv_ws, conv_bs):
        pad = (w.shape[-1] - 1) // 2
        h = jax.lax.conv_general_dilated(
            h, w, window_strides=(1,), padding=[(pad, pad)],
            dimension_numbers=('NCH', 'OIH', 'NCH'), precision=hp)
        h = _gelu(h + b[None, :, None])
    h = jnp.transpose(h, (0, 2, 1))                        # (B, L, D)

    def ln(v, g, be):
        mu = v.mean(-1, keepdims=True)
        var = ((v - mu) ** 2).mean(-1, keepdims=True)
        return (v - mu) / jnp.sqrt(var + 1e-5) * g + be

    mm = partial(jnp.einsum, precision=hp)
    t = _gelu(mm('blc,dc->bld', h, p1w) + p1b)
    t = ln(t, ln1g, ln1b)
    t = _gelu(mm('blc,dc->bld', t, p2w) + p2b)
    t = ln(t, ln2g, ln2b)
    proj = mm('blc,dc->bld', t, p3w) + p3b                 # (B, L, c_out)

    res = mm('blc,dc->bld', y, rw) + rb                    # (B, L, c_out)
    gate = 1.0 / (1.0 + jnp.exp(-(mm('blc,dc->bld', h, gw) + gb)))   # (B, L, 1)
    return gate * proj + (1 - gate) * res


# ----------------------------------------------------------------------------- main

if __name__ == "__main__":
    B, L, D, C = 2, 16, 32, 8                              # batch, seq, d_model, c_out
    key = jax.random.PRNGKey(0)
    kx, kp = jax.random.split(key)
    x = jax.random.normal(kx, (B, L, D), jnp.float32)
    params = init_params(kp, D, C)

    out = projection_attention_with_fft(x, params)
    jax.block_until_ready(out)

    ref = ref_forward(x, params)
    assert out.shape == (B, L, C), out.shape
    # bf16 matmul operands vs. f32 HIGHEST-precision reference -> ~1e-3 level error.
    assert jnp.allclose(out, ref, atol=2e-2, rtol=2e-2), float(jnp.max(jnp.abs(out - ref)))
    print("KERNEL_OK")
</pallas_src>

<mosaic_0001>
module attributes {stable_mosaic.version = 11 : i64} {
  func.func @_paf_kernel(%arg0: i32, %arg1: memref<2x16x32xf32, #tpu.memory_space<vmem>>, %arg2: memref<12x32x32xbf16, #tpu.memory_space<vmem>>, %arg3: memref<32x16xbf16, #tpu.memory_space<vmem>>, %arg4: memref<16x8xbf16, #tpu.memory_space<vmem>>, %arg5: memref<8x8xbf16, #tpu.memory_space<vmem>>, %arg6: memref<32x8xbf16, #tpu.memory_space<vmem>>, %arg7: memref<16x32xf32, #tpu.memory_space<vmem>>, %arg8: memref<2x16x8xf32, #tpu.memory_space<vmem>>, %arg9: memref<2x20x32xbf16, #tpu.memory_space<vmem>>) attributes {dimension_semantics = [#tpu.dimension_semantics<parallel>], iteration_bounds = array<i64: 1>, scalar_prefetch = 0 : i64, scratch_operands = 1 : i64, tpu.core_type = #tpu.core_type<tc>, window_params = [{transform_indices = @transform_0, window_bounds = array<i64: 2, 16, 32>}, {pipeline_mode = #tpu.pipeline_mode<synchronous>, transform_indices = @transform_1, window_bounds = array<i64: 12, 32, 32>}, {pipeline_mode = #tpu.pipeline_mode<synchronous>, transform_indices = @transform_2, window_bounds = array<i64: 32, 16>}, {pipeline_mode = #tpu.pipeline_mode<synchronous>, transform_indices = @transform_3, window_bounds = array<i64: 16, 8>}, {pipeline_mode = #tpu.pipeline_mode<synchronous>, transform_indices = @transform_4, window_bounds = array<i64: 8, 8>}, {pipeline_mode = #tpu.pipeline_mode<synchronous>, transform_indices = @transform_5, window_bounds = array<i64: 32, 8>}, {pipeline_mode = #tpu.pipeline_mode<synchronous>, transform_indices = @transform_6, window_bounds = array<i64: 16, 32>}, {transform_indices = @transform_7, window_bounds = array<i64: 2, 16, 8>}]} {
    %cst = arith.constant 0.000000e+00 : bf16
    %0 = vector.broadcast %cst : bf16 to vector<2x2x32xbf16>
    %c0 = arith.constant 0 : index
    %c0_0 = arith.constant 0 : index
    %c0_1 = arith.constant 0 : index
    %1 = vector.load %arg9[%c0, %c0_0, %c0_1] : memref<2x20x32xbf16, #tpu.memory_space<vmem>>, vector<2x2x32xbf16>
    tpu.vector_store %arg9[%c0, %c0_0, %c0_1], %0 {strides = array<i32>} : memref<2x20x32xbf16, #tpu.memory_space<vmem>>, vector<2x2x32xbf16>,
    %cst_2 = arith.constant 0.000000e+00 : bf16
    %2 = vector.broadcast %cst_2 : bf16 to vector<2x2x32xbf16>
    %c0_3 = arith.constant 0 : index
    %c18 = arith.constant 18 : index
    %c0_4 = arith.constant 0 : index
    %3 = vector.load %arg9[%c0_3, %c18, %c0_4] : memref<2x20x32xbf16, #tpu.memory_space<vmem>>, vector<2x2x32xbf16>
    tpu.vector_store %arg9[%c0_3, %c18, %c0_4], %2 {strides = array<i32>} : memref<2x20x32xbf16, #tpu.memory_space<vmem>>, vector<2x2x32xbf16>,
    %c0_5 = arith.constant 0 : index
    %c0_6 = arith.constant 0 : index
    %c0_7 = arith.constant 0 : index
    %4 = vector.load %arg1[%c0_5, %c0_6, %c0_7] : memref<2x16x32xf32, #tpu.memory_space<vmem>>, vector<2x16x32xf32>
    %5 = vector.shape_cast %4 : vector<2x16x32xf32> to vector<32x32xf32>
    %6 = arith.truncf %5 : vector<32x32xf32> to vector<32x32xbf16>
    %c0_8 = arith.constant 0 : index
    %c0_9 = arith.constant 0 : index
    %c0_10 = arith.constant 0 : index
    %7 = vector.load %arg2[%c0_8, %c0_9, %c0_10] : memref<12x32x32xbf16, #tpu.memory_space<vmem>>, vector<1x32x32xbf16>
    %8 = vector.shape_cast %7 : vector<1x32x32xbf16> to vector<32x32xbf16>
    %cst_11 = arith.constant dense<0.000000e+00> : vector<32x32xf32>
    %9 = tpu.matmul %6, %8, %cst_11 {dimension_numbers = #tpu.dot_dimension_numbers<[1], [0], [0], [1], [0, 0, 1, 1], [], []>} : vector<32x32xbf16>, vector<32x32xbf16>, vector<32x32xf32> -> vector<32x32xf32>
    %c0_12 = arith.constant 0 : index
    %c0_13 = arith.constant 0 : index
    %10 = vector.load %arg7[%c0_12, %c0_13] : memref<16x32xf32, #tpu.memory_space<vmem>>, vector<1x32xf32>
    %11 = vector.broadcast %10 : vector<1x32xf32> to vector<32x32xf32>
    %12 = arith.addf %9, %11 : vector<32x32xf32>
    %cst_14 = arith.constant 5.000000e-01 : f32
    %13 = vector.broadcast %cst_14 : f32 to vector<32x32xf32>
    %14 = arith.mulf %13, %12 : vector<32x32xf32>
    %cst_15 = arith.constant 0.797884583 : f32
    %15 = vector.broadcast %cst_15 : f32 to vector<32x32xf32>
    %16 = arith.mulf %15, %12 : vector<32x32xf32>
    %17 = arith.mulf %12, %12 : vector<32x32xf32>
    %cst_16 = arith.constant 4.471500e-02 : f32
    %18 = vector.broadcast %cst_16 : f32 to vector<32x32xf32>
    %19 = arith.mulf %18, %17 : vector<32x32xf32>
    %cst_17 = arith.constant 1.000000e+00 : f32
    %20 = vector.broadcast %cst_17 : f32 to vector<32x32xf32>
    %21 = arith.addf %20, %19 : vector<32x32xf32>
    %22 = arith.mulf %16, %21 : vector<32x32xf32>
    %23 = math.tanh %22 : vector<32x32xf32>
    %cst_18 = arith.constant 1.000000e+00 : f32
    %24 = vector.broadcast %cst_18 : f32 to vector<32x32xf32>
    %25 = arith.addf %24, %23 : vector<32x32xf32>
    %26 = arith.mulf %14, %25 : vector<32x32xf32>
    %27 = arith.truncf %26 : vector<32x32xf32> to vector<32x32xbf16>
    %28 = vector.shape_cast %27 : vector<32x32xbf16> to vector<2x16x32xbf16>
    %c0_19 = arith.constant 0 : index
    %c2 = arith.constant 2 : index
    %c0_20 = arith.constant 0 : index
    %29 = vector.load %arg9[%c0_19, %c2, %c0_20] : memref<2x20x32xbf16, #tpu.memory_space<vmem>>, vector<2x16x32xbf16>
    tpu.vector_store %arg9[%c0_19, %c2, %c0_20], %28 {strides = array<i32>} : memref<2x20x32xbf16, #tpu.memory_space<vmem>>, vector<2x16x32xbf16>,
    %c0_21 = arith.constant 0 : index
    %c1 = arith.constant 1 : index
    %c0_22 = arith.constant 0 : index
    %30 = vector.load %arg9[%c0_21, %c1, %c0_22] : memref<2x20x32xbf16, #tpu.memory_space<vmem>>, vector<2x16x32xbf16>
    %31 = vector.shape_cast %30 : vector<2x16x32xbf16> to vector<32x32xbf16>
    %c1_23 = arith.constant 1 : index
    %c0_24 = arith.constant 0 : index
    %c0_25 = arith.constant 0 : index
    %32 = vector.load %arg2[%c1_23, %c0_24, %c0_25] : memref<12x32x32xbf16, #tpu.memory_space<vmem>>, vector<1x32x32xbf16>
    %33 = vector.shape_cast %32 : vector<1x32x32xbf16> to vector<32x32xbf16>
    %cst_26 = arith.constant dense<0.000000e+00> : vector<32x32xf32>
    %34 = tpu.matmul %31, %33, %cst_26 {dimension_numbers = #tpu.dot_dimension_numbers<[1], [0], [0], [1], [0, 0, 1, 1], [], []>} : vector<32x32xbf16>, vector<32x32xbf16>, vector<32x32xf32> -> vector<32x32xf32>
    %c0_27 = arith.constant 0 : index
    %c2_28 = arith.constant 2 : index
    %c0_29 = arith.constant 0 : index
    %35 = vector.load %arg9[%c0_27, %c2_28, %c0_29] : memref<2x20x32xbf16, #tpu.memory_space<vmem>>, vector<2x16x32xbf16>
    %36 = vector.shape_cast %35 : vector<2x16x32xbf16> to vector<32x32xbf16>
    %c2_30 = arith.constant 2 : index
    %c0_31 = arith.constant 0 : index
    %c0_32 = arith.constant 0 : index
    %37 = vector.load %arg2[%c2_30, %c0_31, %c0_32] : memref<12x32x32xbf16, #tpu.memory_space<vmem>>, vector<1x32x32xbf16>
    %38 = vector.shape_cast %37 : vector<1x32x32xbf16> to vector<32x32xbf16>
    %cst_33 = arith.constant dense<0.000000e+00> : vector<32x32xf32>
    %39 = tpu.matmul %36, %38, %cst_33 {dimension_numbers = #tpu.dot_dimension_numbers<[1], [0], [0], [1], [0, 0, 1, 1], [], []>} : vector<32x32xbf16>, vector<32x32xbf16>, vector<32x32xf32> -> vector<32x32xf32>
    %40 = arith.addf %34, %39 : vector<32x32xf32>
    %c0_34 = arith.constant 0 : index
    %c3 = arith.constant 3 : index
    %c0_35 = arith.constant 0 : index
    %41 = vector.load %arg9[%c0_34, %c3, %c0_35] : memref<2x20x32xbf16, #tpu.memory_space<vmem>>, vector<2x16x32xbf16>
    %42 = vector.shape_cast %41 : vector<2x16x32xbf16> to vector<32x32xbf16>
    %c3_36 = arith.constant 3 : index
    %c0_37 = arith.constant 0 : index
    %c0_38 = arith.constant 0 : index
    %43 = vector.load %arg2[%c3_36, %c0_37, %c0_38] : memref<12x32x32xbf16, #tpu.memory_space<vmem>>, vector<1x32x32xbf16>
    %44 = vector.shape_cast %43 : vector<1x32x32xbf16> to vector<32x32xbf16>
    %cst_39 = arith.constant dense<0.000000e+00> : vector<32x32xf32>
    %45 = tpu.matmul %42, %44, %cst_39 {dimension_numbers = #tpu.dot_dimension_numbers<[1], [0], [0], [1], [0, 0, 1, 1], [], []>} : vector<32x32xbf16>, vector<32x32xbf16>, vector<32x32xf32> -> vector<32x32xf32>
    %46 = arith.addf %40, %45 : vector<32x32xf32>
    %c1_40 = arith.constant 1 : index
    %c0_41 = arith.constant 0 : index
    %47 = vector.load %arg7[%c1_40, %c0_41] : memref<16x32xf32, #tpu.memory_space<vmem>>, vector<1x32xf32>
    %48 = vector.broadcast %47 : vector<1x32xf32> to vector<32x32xf32>
    %49 = arith.addf %46, %48 : vector<32x32xf32>
    %cst_42 = arith.constant 5.000000e-01 : f32
    %50 = vector.broadcast %cst_42 : f32 to vector<32x32xf32>
    %51 = arith.mulf %50, %49 : vector<32x32xf32>
    %cst_43 = arith.constant 0.797884583 : f32
    %52 = vector.broadcast %cst_43 : f32 to vector<32x32xf32>
    %53 = arith.mulf %52, %49 : vector<32x32xf32>
    %54 = arith.mulf %49, %49 : vector<32x32xf32>
    %cst_44 = arith.constant 4.471500e-02 : f32
    %55 = vector.broadcast %cst_44 : f32 to vector<32x32xf32>
    %56 = arith.mulf %55, %54 : vector<32x32xf32>
    %cst_45 = arith.constant 1.000000e+00 : f32
    %57 = vector.broadcast %cst_45 : f32 to vector<32x32xf32>
    %58 = arith.addf %57, %56 : vector<32x32xf32>
    %59 = arith.mulf %53, %58 : vector<32x32xf32>
    %60 = math.tanh %59 : vector<32x32xf32>
    %cst_46 = arith.constant 1.000000e+00 : f32
    %61 = vector.broadcast %cst_46 : f32 to vector<32x32xf32>
    %62 = arith.addf %61, %60 : vector<32x32xf32>
    %63 = arith.mulf %51, %62 : vector<32x32xf32>
    %64 = arith.truncf %63 : vector<32x32xf32> to vector<32x32xbf16>
    %65 = vector.shape_cast %64 : vector<32x32xbf16> to vector<2x16x32xbf16>
    %c0_47 = arith.constant 0 : index
    %c2_48 = arith.constant 2 : index
    %c0_49 = arith.constant 0 : index
    %66 = vector.load %arg9[%c0_47, %c2_48, %c0_49] : memref<2x20x32xbf16, #tpu.memory_space<vmem>>, vector<2x16x32xbf16>
    tpu.vector_store %arg9[%c0_47, %c2_48, %c0_49], %65 {strides = array<i32>} : memref<2x20x32xbf16, #tpu.memory_space<vmem>>, vector<2x16x32xbf16>,
    %c0_50 = arith.constant 0 : index
    %c0_51 = arith.constant 0 : index
    %c0_52 = arith.constant 0 : index
    %67 = vector.load %arg9[%c0_50, %c0_51, %c0_52] : memref<2x20x32xbf16, #tpu.memory_space<vmem>>, vector<2x16x32xbf16>
    %68 = vector.shape_cast %67 : vector<2x16x32xbf16> to vector<32x32xbf16>
    %c4 = arith.constant 4 : index
    %c0_53 = arith.constant 0 : index
    %c0_54 = arith.constant 0 : index
    %69 = vector.load %arg2[%c4, %c0_53, %c0_54] : memref<12x32x32xbf16, #tpu.memory_space<vmem>>, vector<1x32x32xbf16>
    %70 = vector.shape_cast %69 : vector<1x32x32xbf16> to vector<32x32xbf16>
    %cst_55 = arith.constant dense<0.000000e+00> : vector<32x32xf32>
    %71 = tpu.matmul %68, %70, %cst_55 {dimension_numbers = #tpu.dot_dimension_numbers<[1], [0], [0], [1], [0, 0, 1, 1], [], []>} : vector<32x32xbf16>, vector<32x32xbf16>, vector<32x32xf32> -> vector<32x32xf32>
    %c0_56 = arith.constant 0 : index
    %c1_57 = arith.constant 1 : index
    %c0_58 = arith.constant 0 : index
    %72 = vector.load %arg9[%c0_56, %c1_57, %c0_58] : memref<2x20x32xbf16, #tpu.memory_space<vmem>>, vector<2x16x32xbf16>
    %73 = vector.shape_cast %72 : vector<2x16x32xbf16> to vector<32x32xbf16>
    %c5 = arith.constant 5 : index
    %c0_59 = arith.constant 0 : index
    %c0_60 = arith.constant 0 : index
    %74 = vector.load %arg2[%c5, %c0_59, %c0_60] : memref<12x32x32xbf16, #tpu.memory_space<vmem>>, vector<1x32x32xbf16>
    %75 = vector.shape_cast %74 : vector<1x32x32xbf16> to vector<32x32xbf16>
    %cst_61 = arith.constant dense<0.000000e+00> : vector<32x32xf32>
    %76 = tpu.matmul %73, %75, %cst_61 {dimension_numbers = #tpu.dot_dimension_numbers<[1], [0], [0], [1], [0, 0, 1, 1], [], []>} : vector<32x32xbf16>, vector<32x32xbf16>, vector<32x32xf32> -> vector<32x32xf32>
    %77 = arith.addf %71, %76 : vector<32x32xf32>
    %c0_62 = arith.constant 0 : index
    %c2_63 = arith.constant 2 : index
    %c0_64 = arith.constant 0 : index
    %78 = vector.load %arg9[%c0_62, %c2_63, %c0_64] : memref<2x20x32xbf16, #tpu.memory_space<vmem>>, vector<2x16x32xbf16>
    %79 = vector.shape_cast %78 : vector<2x16x32xbf16> to vector<32x32xbf16>
    %c6 = arith.constant 6 : index
    %c0_65 = arith.constant 0 : index
    %c0_66 = arith.constant 0 : index
    %80 = vector.load %arg2[%c6, %c0_65, %c0_66] : memref<12x32x32xbf16, #tpu.memory_space<vmem>>, vector<1x32x32xbf16>
    %81 = vector.shape_cast %80 : vector<1x32x32xbf16> to vector<32x32xbf16>
    %cst_67 = arith.constant dense<0.000000e+00> : vector<32x32xf32>
    %82 = tpu.matmul %79, %81, %cst_67 {dimension_numbers = #tpu.dot_dimension_numbers<[1], [0], [0], [1], [0, 0, 1, 1], [], []>} : vector<32x32xbf16>, vector<32x32xbf16>, vector<32x32xf32> -> vector<32x32xf32>
    %83 = arith.addf %77, %82 : vector<32x32xf32>
    %c0_68 = arith.constant 0 : index
    %c3_69 = arith.constant 3 : index
    %c0_70 = arith.constant 0 : index
    %84 = vector.load %arg9[%c0_68, %c3_69, %c0_70] : memref<2x20x32xbf16, #tpu.memory_space<vmem>>, vector<2x16x32xbf16>
    %85 = vector.shape_cast %84 : vector<2x16x32xbf16> to vector<32x32xbf16>
    %c7 = arith.constant 7 : index
    %c0_71 = arith.constant 0 : index
    %c0_72 = arith.constant 0 : index
    %86 = vector.load %arg2[%c7, %c0_71, %c0_72] : memref<12x32x32xbf16, #tpu.memory_space<vmem>>, vector<1x32x32xbf16>
    %87 = vector.shape_cast %86 : vector<1x32x32xbf16> to vector<32x32xbf16>
    %cst_73 = arith.constant dense<0.000000e+00> : vector<32x32xf32>
    %88 = tpu.matmul %85, %87, %cst_73 {dimension_numbers = #tpu.dot_dimension_numbers<[1], [0], [0], [1], [0, 0, 1, 1], [], []>} : vector<32x32xbf16>, vector<32x32xbf16>, vector<32x32xf32> -> vector<32x32xf32>
    %89 = arith.addf %83, %88 : vector<32x32xf32>
    %c0_74 = arith.constant 0 : index
    %c4_75 = arith.constant 4 : index
    %c0_76 = arith.constant 0 : index
    %90 = vector.load %arg9[%c0_74, %c4_75, %c0_76] : memref<2x20x32xbf16, #tpu.memory_space<vmem>>, vector<2x16x32xbf16>
    %91 = vector.shape_cast %90 : vector<2x16x32xbf16> to vector<32x32xbf16>
    %c8 = arith.constant 8 : index
    %c0_77 = arith.constant 0 : index
    %c0_78 = arith.constant 0 : index
    %92 = vector.load %arg2[%c8, %c0_77, %c0_78] : memref<12x32x32xbf16, #tpu.memory_space<vmem>>, vector<1x32x32xbf16>
    %93 = vector.shape_cast %92 : vector<1x32x32xbf16> to vector<32x32xbf16>
    %cst_79 = arith.constant dense<0.000000e+00> : vector<32x32xf32>
    %94 = tpu.matmul %91, %93, %cst_79 {dimension_numbers = #tpu.dot_dimension_numbers<[1], [0], [0], [1], [0, 0, 1, 1], [], []>} : vector<32x32xbf16>, vector<32x32xbf16>, vector<32x32xf32> -> vector<32x32xf32>
    %95 = arith.addf %89, %94 : vector<32x32xf32>
    %c2_80 = arith.constant 2 : index
    %c0_81 = arith.constant 0 : index
    %96 = vector.load %arg7[%c2_80, %c0_81] : memref<16x32xf32, #tpu.memory_space<vmem>>, vector<1x32xf32>
    %97 = vector.broadcast %96 : vector<1x32xf32> to vector<32x32xf32>
    %98 = arith.addf %95, %97 : vector<32x32xf32>
    %cst_82 = arith.constant 5.000000e-01 : f32
    %99 = vector.broadcast %cst_82 : f32 to vector<32x32xf32>
    %100 = arith.mulf %99, %98 : vector<32x32xf32>
    %cst_83 = arith.constant 0.797884583 : f32
    %101 = vector.broadcast %cst_83 : f32 to vector<32x32xf32>
    %102 = arith.mulf %101, %98 : vector<32x32xf32>
    %103 = arith.mulf %98, %98 : vector<32x32xf32>
    %cst_84 = arith.constant 4.471500e-02 : f32
    %104 = vector.broadcast %cst_84 : f32 to vector<32x32xf32>
    %105 = arith.mulf %104, %103 : vector<32x32xf32>
    %cst_85 = arith.constant 1.000000e+00 : f32
    %106 = vector.broadcast %cst_85 : f32 to vector<32x32xf32>
    %107 = arith.addf %106, %105 : vector<32x32xf32>
    %108 = arith.mulf %102, %107 : vector<32x32xf32>
    %109 = math.tanh %108 : vector<32x32xf32>
    %cst_86 = arith.constant 1.000000e+00 : f32
    %110 = vector.broadcast %cst_86 : f32 to vector<32x32xf32>
    %111 = arith.addf %110, %109 : vector<32x32xf32>
    %112 = arith.mulf %100, %111 : vector<32x32xf32>
    %113 = arith.truncf %112 : vector<32x32xf32> to vector<32x32xbf16>
    %114 = vector.shape_cast %113 : vector<32x32xbf16> to vector<2x16x32xbf16>
    %c0_87 = arith.constant 0 : index
    %c2_88 = arith.constant 2 : index
    %c0_89 = arith.constant 0 : index
    %115 = vector.load %arg9[%c0_87, %c2_88, %c0_89] : memref<2x20x32xbf16, #tpu.memory_space<vmem>>, vector<2x16x32xbf16>
    tpu.vector_store %arg9[%c0_87, %c2_88, %c0_89], %114 {strides = array<i32>} : memref<2x20x32xbf16, #tpu.memory_space<vmem>>, vector<2x16x32xbf16>,
    %c0_90 = arith.constant 0 : index
    %c1_91 = arith.constant 1 : index
    %c0_92 = arith.constant 0 : index
    %116 = vector.load %arg9[%c0_90, %c1_91, %c0_92] : memref<2x20x32xbf16, #tpu.memory_space<vmem>>, vector<2x16x32xbf16>
    %117 = vector.shape_cast %116 : vector<2x16x32xbf16> to vector<32x32xbf16>
    %c9 = arith.constant 9 : index
    %c0_93 = arith.constant 0 : index
    %c0_94 = arith.constant 0 : index
    %118 = vector.load %arg2[%c9, %c0_93, %c0_94] : memref<12x32x32xbf16, #tpu.memory_space<vmem>>, vector<1x32x32xbf16>
    %119 = vector.shape_cast %118 : vector<1x32x32xbf16> to vector<32x32xbf16>
    %cst_95 = arith.constant dense<0.000000e+00> : vector<32x32xf32>
    %120 = tpu.matmul %117, %119, %cst_95 {dimension_numbers = #tpu.dot_dimension_numbers<[1], [0], [0], [1], [0, 0, 1, 1], [], []>} : vector<32x32xbf16>, vector<32x32xbf16>, vector<32x32xf32> -> vector<32x32xf32>
    %c0_96 = arith.constant 0 : index
    %c2_97 = arith.constant 2 : index
    %c0_98 = arith.constant 0 : index
    %121 = vector.load %arg9[%c0_96, %c2_97, %c0_98] : memref<2x20x32xbf16, #tpu.memory_space<vmem>>, vector<2x16x32xbf16>
    %122 = vector.shape_cast %121 : vector<2x16x32xbf16> to vector<32x32xbf16>
    %c10 = arith.constant 10 : index
    %c0_99 = arith.constant 0 : index
    %c0_100 = arith.constant 0 : index
    %123 = vector.load %arg2[%c10, %c0_99, %c0_100] : memref<12x32x32xbf16, #tpu.memory_space<vmem>>, vector<1x32x32xbf16>
    %124 = vector.shape_cast %123 : vector<1x32x32xbf16> to vector<32x32xbf16>
    %cst_101 = arith.constant dense<0.000000e+00> : vector<32x32xf32>
    %125 = tpu.matmul %122, %124, %cst_101 {dimension_numbers = #tpu.dot_dimension_numbers<[1], [0], [0], [1], [0, 0, 1, 1], [], []>} : vector<32x32xbf16>, vector<32x32xbf16>, vector<32x32xf32> -> vector<32x32xf32>
    %126 = arith.addf %120, %125 : vector<32x32xf32>
    %c0_102 = arith.constant 0 : index
    %c3_103 = arith.constant 3 : index
    %c0_104 = arith.constant 0 : index
    %127 = vector.load %arg9[%c0_102, %c3_103, %c0_104] : memref<2x20x32xbf16, #tpu.memory_space<vmem>>, vector<2x16x32xbf16>
    %128 = vector.shape_cast %127 : vector<2x16x32xbf16> to vector<32x32xbf16>
    %c11 = arith.constant 11 : index
    %c0_105 = arith.constant 0 : index
    %c0_106 = arith.constant 0 : index
    %129 = vector.load %arg2[%c11, %c0_105, %c0_106] : memref<12x32x32xbf16, #tpu.memory_space<vmem>>, vector<1x32x32xbf16>
    %130 = vector.shape_cast %129 : vector<1x32x32xbf16> to vector<32x32xbf16>
    %cst_107 = arith.constant dense<0.000000e+00> : vector<32x32xf32>
    %131 = tpu.matmul %128, %130, %cst_107 {dimension_numbers = #tpu.dot_dimension_numbers<[1], [0], [0], [1], [0, 0, 1, 1], [], []>} : vector<32x32xbf16>, vector<32x32xbf16>, vector<32x32xf32> -> vector<32x32xf32>
    %132 = arith.addf %126, %131 : vector<32x32xf32>
    %c3_108 = arith.constant 3 : index
    %c0_109 = arith.constant 0 : index
    %133 = vector.load %arg7[%c3_108, %c0_109] : memref<16x32xf32, #tpu.memory_space<vmem>>, vector<1x32xf32>
    %134 = vector.broadcast %133 : vector<1x32xf32> to vector<32x32xf32>
    %135 = arith.addf %132, %134 : vector<32x32xf32>
    %cst_110 = arith.constant 5.000000e-01 : f32
    %136 = vector.broadcast %cst_110 : f32 to vector<32x32xf32>
    %137 = arith.mulf %136, %135 : vector<32x32xf32>
    %cst_111 = arith.constant 0.797884583 : f32
    %138 = vector.broadcast %cst_111 : f32 to vector<32x32xf32>
    %139 = arith.mulf %138, %135 : vector<32x32xf32>
    %140 = arith.mulf %135, %135 : vector<32x32xf32>
    %cst_112 = arith.constant 4.471500e-02 : f32
    %141 = vector.broadcast %cst_112 : f32 to vector<32x32xf32>
    %142 = arith.mulf %141, %140 : vector<32x32xf32>
    %cst_113 = arith.constant 1.000000e+00 : f32
    %143 = vector.broadcast %cst_113 : f32 to vector<32x32xf32>
    %144 = arith.addf %143, %142 : vector<32x32xf32>
    %145 = arith.mulf %139, %144 : vector<32x32xf32>
    %146 = math.tanh %145 : vector<32x32xf32>
    %cst_114 = arith.constant 1.000000e+00 : f32
    %147 = vector.broadcast %cst_114 : f32 to vector<32x32xf32>
    %148 = arith.addf %147, %146 : vector<32x32xf32>
    %149 = arith.mulf %137, %148 : vector<32x32xf32>
    %150 = arith.truncf %149 : vector<32x32xf32> to vector<32x32xbf16>
    %c0_115 = arith.constant 0 : index
    %c0_116 = arith.constant 0 : index
    %151 = vector.load %arg3[%c0_115, %c0_116] : memref<32x16xbf16, #tpu.memory_space<vmem>>, vector<32x16xbf16>
    %cst_117 = arith.constant dense<0.000000e+00> : vector<32x16xf32>
    %152 = tpu.matmul %150, %151, %cst_117 {dimension_numbers = #tpu.dot_dimension_numbers<[1], [0], [0], [1], [0, 0, 1, 1], [], []>} : vector<32x32xbf16>, vector<32x16xbf16>, vector<32x16xf32> -> vector<32x16xf32>
    %c4_118 = arith.constant 4 : index
    %c0_119 = arith.constant 0 : index
    %153 = vector.load %arg7[%c4_118, %c0_119] : memref<16x32xf32, #tpu.memory_space<vmem>>, vector<1x16xf32>
    %154 = vector.broadcast %153 : vector<1x16xf32> to vector<32x16xf32>
    %155 = arith.addf %152, %154 : vector<32x16xf32>
    %cst_120 = arith.constant 5.000000e-01 : f32
    %156 = vector.broadcast %cst_120 : f32 to vector<32x16xf32>
    %157 = arith.mulf %156, %155 : vector<32x16xf32>
    %cst_121 = arith.constant 0.797884583 : f32
    %158 = vector.broadcast %cst_121 : f32 to vector<32x16xf32>
    %159 = arith.mulf %158, %155 : vector<32x16xf32>
    %160 = arith.mulf %155, %155 : vector<32x16xf32>
    %cst_122 = arith.constant 4.471500e-02 : f32
    %161 = vector.broadcast %cst_122 : f32 to vector<32x16xf32>
    %162 = arith.mulf %161, %160 : vector<32x16xf32>
    %cst_123 = arith.constant 1.000000e+00 : f32
    %163 = vector.broadcast %cst_123 : f32 to vector<32x16xf32>
    %164 = arith.addf %163, %162 : vector<32x16xf32>
    %165 = arith.mulf %159, %164 : vector<32x16xf32>
    %166 = math.tanh %165 : vector<32x16xf32>
    %cst_124 = arith.constant 1.000000e+00 : f32
    %167 = vector.broadcast %cst_124 : f32 to vector<32x16xf32>
    %168 = arith.addf %167, %166 : vector<32x16xf32>
    %169 = arith.mulf %157, %168 : vector<32x16xf32>
    %cst_125 = arith.constant dense<0.000000e+00> : vector<32xf32>
    %170 = vector.multi_reduction <add>, %169, %cst_125 [1] : vector<32x16xf32> to vector<32xf32>
    %171 = vector.shape_cast %170 : vector<32xf32> to vector<32x1xf32>
    %cst_126 = arith.constant 1.600000e+01 : f32
    %172 = vector.broadcast %cst_126 : f32 to vector<32x1xf32>
    %173 = arith.divf %171, %172 : vector<32x1xf32>
    %174 = vector.broadcast %173 : vector<32x1xf32> to vector<32x16xf32>
    %175 = arith.subf %169, %174 : vector<32x16xf32>
    %176 = arith.mulf %175, %175 : vector<32x16xf32>
    %cst_127 = arith.constant dense<0.000000e+00> : vector<32xf32>
    %177 = vector.multi_reduction <add>, %176, %cst_127 [1] : vector<32x16xf32> to vector<32xf32>
    %178 = vector.shape_cast %177 : vector<32xf32> to vector<32x1xf32>
    %cst_128 = arith.constant 1.600000e+01 : f32
    %179 = vector.broadcast %cst_128 : f32 to vector<32x1xf32>
    %180 = arith.divf %178, %179 : vector<32x1xf32>
    %cst_129 = arith.constant 9.99999974E-6 : f32
    %181 = vector.broadcast %cst_129 : f32 to vector<32x1xf32>
    %182 = arith.addf %180, %181 : vector<32x1xf32>
    %183 = math.rsqrt %182 : vector<32x1xf32>
    %184 = vector.broadcast %183 : vector<32x1xf32> to vector<32x16xf32>
    %185 = arith.mulf %175, %184 : vector<32x16xf32>
    %c5_130 = arith.constant 5 : index
    %c0_131 = arith.constant 0 : index
    %186 = vector.load %arg7[%c5_130, %c0_131] : memref<16x32xf32, #tpu.memory_space<vmem>>, vector<1x16xf32>
    %187 = vector.broadcast %186 : vector<1x16xf32> to vector<32x16xf32>
    %188 = arith.mulf %185, %187 : vector<32x16xf32>
    %c6_132 = arith.constant 6 : index
    %c0_133 = arith.constant 0 : index
    %189 = vector.load %arg7[%c6_132, %c0_133] : memref<16x32xf32, #tpu.memory_space<vmem>>, vector<1x16xf32>
    %190 = vector.broadcast %189 : vector<1x16xf32> to vector<32x16xf32>
    %191 = arith.addf %188, %190 : vector<32x16xf32>
    %192 = arith.truncf %191 : vector<32x16xf32> to vector<32x16xbf16>
    %c0_134 = arith.constant 0 : index
    %c0_135 = arith.constant 0 : index
    %193 = vector.load %arg4[%c0_134, %c0_135] : memref<16x8xbf16, #tpu.memory_space<vmem>>, vector<16x8xbf16>
    %cst_136 = arith.constant dense<0.000000e+00> : vector<32x8xf32>
    %194 = tpu.matmul %192, %193, %cst_136 {dimension_numbers = #tpu.dot_dimension_numbers<[1], [0], [0], [1], [0, 0, 1, 1], [], []>} : vector<32x16xbf16>, vector<16x8xbf16>, vector<32x8xf32> -> vector<32x8xf32>
    %c7_137 = arith.constant 7 : index
    %c0_138 = arith.constant 0 : index
    %195 = vector.load %arg7[%c7_137, %c0_138] : memref<16x32xf32, #tpu.memory_space<vmem>>, vector<1x8xf32>
    %196 = vector.broadcast %195 : vector<1x8xf32> to vector<32x8xf32>
    %197 = arith.addf %194, %196 : vector<32x8xf32>
    %cst_139 = arith.constant 5.000000e-01 : f32
    %198 = vector.broadcast %cst_139 : f32 to vector<32x8xf32>
    %199 = arith.mulf %198, %197 : vector<32x8xf32>
    %cst_140 = arith.constant 0.797884583 : f32
    %200 = vector.broadcast %cst_140 : f32 to vector<32x8xf32>
    %201 = arith.mulf %200, %197 : vector<32x8xf32>
    %202 = arith.mulf %197, %197 : vector<32x8xf32>
    %cst_141 = arith.constant 4.471500e-02 : f32
    %203 = vector.broadcast %cst_141 : f32 to vector<32x8xf32>
    %204 = arith.mulf %203, %202 : vector<32x8xf32>
    %cst_142 = arith.constant 1.000000e+00 : f32
    %205 = vector.broadcast %cst_142 : f32 to vector<32x8xf32>
    %206 = arith.addf %205, %204 : vector<32x8xf32>
    %207 = arith.mulf %201, %206 : vector<32x8xf32>
    %208 = math.tanh %207 : vector<32x8xf32>
    %cst_143 = arith.constant 1.000000e+00 : f32
    %209 = vector.broadcast %cst_143 : f32 to vector<32x8xf32>
    %210 = arith.addf %209, %208 : vector<32x8xf32>
    %211 = arith.mulf %199, %210 : vector<32x8xf32>
    %cst_144 = arith.constant dense<0.000000e+00> : vector<32xf32>
    %212 = vector.multi_reduction <add>, %211, %cst_144 [1] : vector<32x8xf32> to vector<32xf32>
    %213 = vector.shape_cast %212 : vector<32xf32> to vector<32x1xf32>
    %cst_145 = arith.constant 8.000000e+00 : f32
    %214 = vector.broadcast %cst_145 : f32 to vector<32x1xf32>
    %215 = arith.divf %213, %214 : vector<32x1xf32>
    %216 = vector.broadcast %215 : vector<32x1xf32> to vector<32x8xf32>
    %217 = arith.subf %211, %216 : vector<32x8xf32>
    %218 = arith.mulf %217, %217 : vector<32x8xf32>
    %cst_146 = arith.constant dense<0.000000e+00> : vector<32xf32>
    %219 = vector.multi_reduction <add>, %218, %cst_146 [1] : vector<32x8xf32> to vector<32xf32>
    %220 = vector.shape_cast %219 : vector<32xf32> to vector<32x1xf32>
    %cst_147 = arith.constant 8.000000e+00 : f32
    %221 = vector.broadcast %cst_147 : f32 to vector<32x1xf32>
    %222 = arith.divf %220, %221 : vector<32x1xf32>
    %cst_148 = arith.constant 9.99999974E-6 : f32
    %223 = vector.broadcast %cst_148 : f32 to vector<32x1xf32>
    %224 = arith.addf %222, %223 : vector<32x1xf32>
    %225 = math.rsqrt %224 : vector<32x1xf32>
    %226 = vector.broadcast %225 : vector<32x1xf32> to vector<32x8xf32>
    %227 = arith.mulf %217, %226 : vector<32x8xf32>
    %c8_149 = arith.constant 8 : index
    %c0_150 = arith.constant 0 : index
    %228 = vector.load %arg7[%c8_149, %c0_150] : memref<16x32xf32, #tpu.memory_space<vmem>>, vector<1x8xf32>
    %229 = vector.broadcast %228 : vector<1x8xf32> to vector<32x8xf32>
    %230 = arith.mulf %227, %229 : vector<32x8xf32>
    %c9_151 = arith.constant 9 : index
    %c0_152 = arith.constant 0 : index
    %231 = vector.load %arg7[%c9_151, %c0_152] : memref<16x32xf32, #tpu.memory_space<vmem>>, vector<1x8xf32>
    %232 = vector.broadcast %231 : vector<1x8xf32> to vector<32x8xf32>
    %233 = arith.addf %230, %232 : vector<32x8xf32>
    %234 = arith.truncf %233 : vector<32x8xf32> to vector<32x8xbf16>
    %c0_153 = arith.constant 0 : index
    %c0_154 = arith.constant 0 : index
    %235 = vector.load %arg5[%c0_153, %c0_154] : memref<8x8xbf16, #tpu.memory_space<vmem>>, vector<8x8xbf16>
    %cst_155 = arith.constant dense<0.000000e+00> : vector<32x8xf32>
    %236 = tpu.matmul %234, %235, %cst_155 {dimension_numbers = #tpu.dot_dimension_numbers<[1], [0], [0], [1], [0, 0, 1, 1], [], []>} : vector<32x8xbf16>, vector<8x8xbf16>, vector<32x8xf32> -> vector<32x8xf32>
    %c10_156 = arith.constant 10 : index
    %c0_157 = arith.constant 0 : index
    %237 = vector.load %arg7[%c10_156, %c0_157] : memref<16x32xf32, #tpu.memory_space<vmem>>, vector<1x8xf32>
    %238 = vector.broadcast %237 : vector<1x8xf32> to vector<32x8xf32>
    %239 = arith.addf %236, %238 : vector<32x8xf32>
    %c0_158 = arith.constant 0 : index
    %c0_159 = arith.constant 0 : index
    %240 = vector.load %arg6[%c0_158, %c0_159] : memref<32x8xbf16, #tpu.memory_space<vmem>>, vector<32x8xbf16>
    %cst_160 = arith.constant dense<0.000000e+00> : vector<32x8xf32>
    %241 = tpu.matmul %6, %240, %cst_160 {dimension_numbers = #tpu.dot_dimension_numbers<[1], [0], [0], [1], [0, 0, 1, 1], [], []>} : vector<32x32xbf16>, vector<32x8xbf16>, vector<32x8xf32> -> vector<32x8xf32>
    %c13 = arith.constant 13 : index
    %c0_161 = arith.constant 0 : index
    %242 = vector.load %arg7[%c13, %c0_161] : memref<16x32xf32, #tpu.memory_space<vmem>>, vector<1x8xf32>
    %243 = vector.broadcast %242 : vector<1x8xf32> to vector<32x8xf32>
    %244 = arith.addf %241, %243 : vector<32x8xf32>
    %c11_162 = arith.constant 11 : index
    %c0_163 = arith.constant 0 : index
    %245 = vector.load %arg7[%c11_162, %c0_163] : memref<16x32xf32, #tpu.memory_space<vmem>>, vector<1x32xf32>
    %246 = vector.broadcast %245 : vector<1x32xf32> to vector<32x32xf32>
    %247 = arith.mulf %149, %246 : vector<32x32xf32>
    %cst_164 = arith.constant dense<0.000000e+00> : vector<32xf32>
    %248 = vector.multi_reduction <add>, %247, %cst_164 [1] : vector<32x32xf32> to vector<32xf32>
    %249 = vector.shape_cast %248 : vector<32xf32> to vector<32x1xf32>
    %c12 = arith.constant 12 : index
    %c0_165 = arith.constant 0 : index
    %250 = vector.load %arg7[%c12, %c0_165] : memref<16x32xf32, #tpu.memory_space<vmem>>, vector<1x1xf32>
    %251 = vector.broadcast %250 : vector<1x1xf32> to vector<32x1xf32>
    %252 = arith.addf %249, %251 : vector<32x1xf32>
    %cst_166 = arith.constant 5.000000e-01 : f32
    %253 = vector.broadcast %cst_166 : f32 to vector<32x1xf32>
    %254 = arith.mulf %253, %252 : vector<32x1xf32>
    %255 = math.tanh %254 : vector<32x1xf32>
    %cst_167 = arith.constant 1.000000e+00 : f32
    %256 = vector.broadcast %cst_167 : f32 to vector<32x1xf32>
    %257 = arith.addf %256, %255 : vector<32x1xf32>
    %cst_168 = arith.constant 5.000000e-01 : f32
    %258 = vector.broadcast %cst_168 : f32 to vector<32x1xf32>
    %259 = arith.mulf %258, %257 : vector<32x1xf32>
    %260 = vector.broadcast %259 : vector<32x1xf32> to vector<32x8xf32>
    %261 = arith.mulf %260, %239 : vector<32x8xf32>
    %cst_169 = arith.constant 1.000000e+00 : f32
    %262 = vector.broadcast %cst_169 : f32 to vector<32x1xf32>
    %263 = arith.subf %262, %259 : vector<32x1xf32>
    %264 = vector.broadcast %263 : vector<32x1xf32> to vector<32x8xf32>
    %265 = arith.mulf %264, %244 : vector<32x8xf32>
    %266 = arith.addf %261, %265 : vector<32x8xf32>
    %267 = vector.shape_cast %266 : vector<32x8xf32> to vector<2x16x8xf32>
    %c0_170 = arith.constant 0 : index
    %c0_171 = arith.constant 0 : index
    %c0_172 = arith.constant 0 : index
    %268 = vector.load %arg8[%c0_170, %c0_171, %c0_172] : memref<2x16x8xf32, #tpu.memory_space<vmem>>, vector<2x16x8xf32>
    tpu.vector_store %arg8[%c0_170, %c0_171, %c0_172], %267 {strides = array<i32>} : memref<2x16x8xf32, #tpu.memory_space<vmem>>, vector<2x16x8xf32>,
    return
  }
  func.func @transform_0(%arg0: i32) -> (i32, i32, i32) {
    %c0_i32 = arith.constant 0 : i32
    %c0_i32_0 = arith.constant 0 : i32
    %c0_i32_1 = arith.constant 0 : i32
    return %arg0, %c0_i32, %c0_i32_0 : i32, i32, i32
  }
  func.func @transform_1(%arg0: i32) -> (i32, i32, i32) {
    %c0_i32 = arith.constant 0 : i32
    %c0_i32_0 = arith.constant 0 : i32
    %c0_i32_1 = arith.constant 0 : i32
    %c0_i32_2 = arith.constant 0 : i32
    return %c0_i32, %c0_i32_0, %c0_i32_1 : i32, i32, i32
  }
  func.func @transform_2(%arg0: i32) -> (i32, i32) {
    %c0_i32 = arith.constant 0 : i32
    %c0_i32_0 = arith.constant 0 : i32
    %c0_i32_1 = arith.constant 0 : i32
    return %c0_i32, %c0_i32_0 : i32, i32
  }
  func.func @transform_3(%arg0: i32) -> (i32, i32) {
    %c0_i32 = arith.constant 0 : i32
    %c0_i32_0 = arith.constant 0 : i32
    %c0_i32_1 = arith.constant 0 : i32
    return %c0_i32, %c0_i32_0 : i32, i32
  }
  func.func @transform_4(%arg0: i32) -> (i32, i32) {
    %c0_i32 = arith.constant 0 : i32
    %c0_i32_0 = arith.constant 0 : i32
    %c0_i32_1 = arith.constant 0 : i32
    return %c0_i32, %c0_i32_0 : i32, i32
  }
  func.func @transform_5(%arg0: i32) -> (i32, i32) {
    %c0_i32 = arith.constant 0 : i32
    %c0_i32_0 = arith.constant 0 : i32
    %c0_i32_1 = arith.constant 0 : i32
    return %c0_i32, %c0_i32_0 : i32, i32
  }
  func.func @transform_6(%arg0: i32) -> (i32, i32) {
    %c0_i32 = arith.constant 0 : i32
    %c0_i32_0 = arith.constant 0 : i32
    %c0_i32_1 = arith.constant 0 : i32
    return %c0_i32, %c0_i32_0 : i32, i32
  }
  func.func @transform_7(%arg0: i32) -> (i32, i32, i32) {
    %c0_i32 = arith.constant 0 : i32
    %c0_i32_0 = arith.constant 0 : i32
    %c0_i32_1 = arith.constant 0 : i32
    return %arg0, %c0_i32, %c0_i32_0 : i32, i32, i32
  }
}

</mosaic_0001>

<llo_original>
// kernel: tpu_custom_call.1
$region0: #{tpu_custom_call.1}
  #allocation0 [shape = 'u32[]', space=smem, size = 0x4, offset = 0x4, fixed_abs, tag = 'smem constant byte address 0x4 - core index']
  #allocation1 [shape = 'u32[144,128]{1,0:T(1,128)}', space=vmem, size = 0x12000, scoped, tag = 'internal scratch']
  #allocation2 [shape = 'bf16[2,20,32]{2,1,0:T(8,128)(2,1)}', space=vmem, size = 0x3000, scoped, tag = 'scratch operand']
  %s0 = inlined_call_operand.vmem [shape: f32[2,16,32], index: 0, kind: input, shape index: {}]
  %s1 = inlined_call_operand.hbm [shape: bf16[12,32,32], index: 1, kind: input, shape index: {}]
  %s2 = inlined_call_operand.vmem [shape: bf16[32,16], index: 2, kind: input, shape index: {}]
  %s3 = inlined_call_operand.vmem [shape: bf16[16,8], index: 3, kind: input, shape index: {}]
  %s4 = inlined_call_operand.hbm [shape: bf16[8,8], index: 4, kind: input, shape index: {}]
  %s5 = inlined_call_operand.vmem [shape: bf16[32,8], index: 5, kind: input, shape index: {}]
  %s6 = inlined_call_operand.vmem [shape: f32[16,32], index: 6, kind: input, shape index: {}]
  %s7 = inlined_call_operand.vmem [shape: f32[2,16,8], index: 7, kind: output, shape index: {}]
  %s8 = sld [smem:[#allocation0]]
  $region46: #{tpu_custom_call.1} parent=0
    _
  %s10 = ssub.s32 1, %s8
  %s11 = scalar_select 0, %s10, %s8
  $region1: #{tpu_custom_call.1} parent=0
    #allocation3 [shape = 'u8[98304]{0}', space=vmem, size = 0x18000, scoped, tag = 'input window, operand 1, single buffered']
    #allocation4 [shape = 's32[1]{0}', space=sflag, size = 0x4, scoped, tag = 'scoped memory for tpu_custom_call.1']
    #allocation5 [shape = 'u8[2048]{0}', space=vmem, size = 0x800, scoped, tag = 'input window, operand 4, single buffered']
    #allocation6 [shape = 's32[1]{0}', space=sflag, size = 0x4, scoped, tag = 'scoped memory for tpu_custom_call.1']
    %12 = vsyncpa [#allocation4], 0
    %13 = vsyncpa [#allocation6], 0
    // Predicated region
    $region2: #{tpu_custom_call.1} parent=1 // pred_check
      _
    $region3: #{tpu_custom_call.1} parent=1 // pred_check_branch
      %15 = sbr.rel (0) target = $region5
    $region4: #{tpu_custom_call.1} parent=1 // pred_region
      _
    $region5: #{tpu_custom_call.1} parent=1 // pred_fallthru
      _
    // Predicated region
    $region6: #{tpu_custom_call.1} parent=1 // pred_check
      _
    $region7: #{tpu_custom_call.1} parent=1 // pred_check_branch
      %17 = sbr.rel (0) target = $region9
    $region8: #{tpu_custom_call.1} parent=1 // pred_region
      %s19 = ssub.s32 3072, 3072
      %20 = vsyncadd [#allocation4], %s19
      %s21 = sshll.u32 [#allocation3], 4
      %s22 = int_to_ptr.vmem [resolvable:$true] %s21
      %27 = dma.hbm_to_vmem [thread:$0]  %s1, 3072, %s22, [#allocation4], 64, 64, 4
    $region9: #{tpu_custom_call.1} parent=1 // pred_fallthru
      _
    // Predicated region
    $region10: #{tpu_custom_call.1} parent=1 // pred_check
      _
    $region11: #{tpu_custom_call.1} parent=1 // pred_check_branch
      %29 = sbr.rel (0) target = $region13
    $region12: #{tpu_custom_call.1} parent=1 // pred_region
      _
    $region13: #{tpu_custom_call.1} parent=1 // pred_fallthru
      _
    // Predicated region
    $region14: #{tpu_custom_call.1} parent=1 // pred_check
      _
    $region15: #{tpu_custom_call.1} parent=1 // pred_check_branch
      %31 = sbr.rel (0) target = $region17
    $region16: #{tpu_custom_call.1} parent=1 // pred_region
      _
    $region17: #{tpu_custom_call.1} parent=1 // pred_fallthru
      _
    // Predicated region
    $region18: #{tpu_custom_call.1} parent=1 // pred_check
      _
    $region19: #{tpu_custom_call.1} parent=1 // pred_check_branch
      %33 = sbr.rel (0) target = $region21
    $region20: #{tpu_custom_call.1} parent=1 // pred_region
      %s35 = ssub.s32 64, 64
      %36 = vsyncadd [#allocation6], %s35
      %s38 = sshll.u32 [#allocation5], 4
      %s39 = int_to_ptr.vmem [resolvable:$true] %s38
      %41 = dma.hbm_to_vmem [thread:$0]  %s4, 64, %s39, [#allocation6]
    $region21: #{tpu_custom_call.1} parent=1 // pred_fallthru
      _
    // Predicated region
    $region22: #{tpu_custom_call.1} parent=1 // pred_check
      _
    $region23: #{tpu_custom_call.1} parent=1 // pred_check_branch
      %43 = sbr.rel (0) target = $region25
    $region24: #{tpu_custom_call.1} parent=1 // pred_region
      _
    $region25: #{tpu_custom_call.1} parent=1 // pred_fallthru
      _
    // Predicated region
    $region26: #{tpu_custom_call.1} parent=1 // pred_check
      _
    $region27: #{tpu_custom_call.1} parent=1 // pred_check_branch
      %45 = sbr.rel (0) target = $region29
    $region28: #{tpu_custom_call.1} parent=1 // pred_region
      _
    $region29: #{tpu_custom_call.1} parent=1 // pred_fallthru
      _
    // Predicated region
    $region30: #{tpu_custom_call.1} parent=1 // pred_check
      _
    $region31: #{tpu_custom_call.1} parent=1 // pred_check_branch
      %47 = sbr.rel (0) target = $region33
    $region32: #{tpu_custom_call.1} parent=1 // pred_region
      %48 = dma.done [#allocation4], 3072
    $region33: #{tpu_custom_call.1} parent=1 // pred_fallthru
      _
    // Predicated region
    $region34: #{tpu_custom_call.1} parent=1 // pred_check
      _
    $region35: #{tpu_custom_call.1} parent=1 // pred_check_branch
      %50 = sbr.rel (0) target = $region37
    $region36: #{tpu_custom_call.1} parent=1 // pred_region
      %51 = dma.done [#allocation6], 64
    $region37: #{tpu_custom_call.1} parent=1 // pred_fallthru
      _
    %vm53 = vcmask 253952
    %54 = vst.msk [vmem:[#allocation2] sm:$0x1] %vm53, 0
    %55 = vst.msk [vmem:[#allocation2 + $0xc] sm:$0x1] %vm53, 0
    %vm56 = vcmask 254977
    %57 = vst.msk [vmem:[#allocation2 + $0x8] sm:$0x2] %vm56, 0
    %58 = vst.msk [vmem:[#allocation2 + $0x14] sm:$0x2] %vm56, 0
    %v59 = vld [vmem:[%s0] sm:$0xff]
    %v60 = vld [vmem:[%s0 + $0x8] sm:$0xff]
    %v61 = vld [vmem:[%s0 + $0x10] sm:$0xff]
    %v62 = vld [vmem:[%s0 + $0x18] sm:$0xff]
    %v63 = vpack.c.bf16 %v60, %v59
    %v64 = vpack.c.bf16 %v62, %v61
    %v65 = vld [vmem:[#allocation3] sm:$0xf]
    %v66 = vld [vmem:[#allocation3 + $0x4] sm:$0xf]
    %v67 = vld [vmem:[#allocation3 + $0x8] sm:$0xf]
    %v68 = vld [vmem:[#allocation3 + $0xc] sm:$0xf]
    %v69 = vld [vmem:[%s6] sm:$0x1]
    %v70 = vlaneseq
    %v71 = vshrl.u32 %v70, 7
    %v72 = vsub.s32 0, %v71
    %v73 = vrot.slane %v69, %v72
    %v78 = vunpack.c.l.b16 %v65
    %v79 = vunpack.c.l.b16 %v66
    %v80 = vunpack.c.l.b16 %v67
    %v81 = vunpack.c.l.b16 %v68
    %v82 = vpack.c.b16 %v79, %v78
    %v83 = vpack.c.b16 %v81, %v80
    %vm86 = vcmask 261120
    %v88 = vsel %vm86, %v63, 0
    %v91 = vsel %vm86, %v64, 0
    %93 = vmatprep.subr.bf16.mxu0 0
    %94 = vmatpush1.bf16.msra.mxu0 0
    %95 = vmatprep.subr.bf16.mxu0 0
    %96 = vmatpush1.bf16.msra.mxu0 0
    %97 = vmatprep.subr.bf16.mxu0 0
    %98 = vmatpush1.bf16.msra.mxu0 0
    %99 = vmatprep.subr.bf16.mxu0 0
    %100 = vmatpush1.bf16.msra.mxu0 0
    %101 = vmatprep.subr.bf16.mxu0 0
    %102 = vmatpush1.bf16.msra.mxu0 0
    %103 = vmatprep.subr.bf16.mxu0 0
    %104 = vmatpush1.bf16.msra.mxu0 0
    %105 = vmatprep.subr.bf16.mxu0 0
    %106 = vmatpush1.bf16.msra.mxu0 %v83
    %107 = vmatprep.subr.bf16.mxu0 0
    %108 = vmatpush1.bf16.msra.mxu0 %v82
    %109 = vmatprep.subr.bf16.mxu0 0
    %110 = vmatpush2.bf16.msra.mxu0 0
    %111 = vmatprep.subr.bf16.mxu0 0
    %112 = vmatpush2.bf16.msra.mxu0 0
    %113 = vmatprep.subr.bf16.mxu0 0
    %114 = vmatpush2.bf16.msra.mxu0 0
    %115 = vmatprep.subr.bf16.mxu0 0
    %116 = vmatpush2.bf16.msra.mxu0 0
    %117 = vmatprep.subr.bf16.mxu0 0
    %118 = vmatpush2.bf16.msra.mxu0 0
    %119 = vmatprep.subr.bf16.mxu0 0
    %120 = vmatpush2.bf16.msra.mxu0 0
    %121 = vmatprep.subr.bf16.mxu0 0
    %122 = vmatpush2.bf16.msra.mxu0 0
    %123 = vmatprep.subr.bf16.mxu0 0
    %124 = vmatpush2.bf16.msra.mxu0 0
    %125 = vmatprep.mubr.bf16.mxu0 0
    %126 = vmatmul.mubr.bf16.gmra.mxu0 %v88
    %v127 = vpop.f32.mrf.mxu0
    %v128 = vadd.f32 %v73, %v127
    %v129 = vpop.f32.mrf.mxu0
    %v130 = vpop.f32.mrf.mxu0
    %v131 = vadd.f32 %v73, %v130
    %v132 = vpop.f32.mrf.mxu0
    %133 = vmatprep.mubr.bf16.mxu0 0
    %134 = vmatmul.mubr.bf16.gmra.mxu0 %v91
    %v135 = vpop.f32.mrf.mxu0
    %v136 = vadd.f32 %v73, %v135
    %v137 = vpop.f32.mrf.mxu0
    %v138 = vpop.f32.mrf.mxu0
    %v139 = vadd.f32 %v73, %v138
    %v140 = vpop.f32.mrf.mxu0
    %141 = vdwg.mxu0
    %v142 = vmul.f32 %v128, 0.5
    %v143 = vmul.f32 %v131, 0.5
    %v144 = vmul.f32 %v136, 0.5
    %v145 = vmul.f32 %v139, 0.5
    %v146 = vmul.f32 %v128, 0.7978846
    %v147 = vmul.f32 %v131, 0.7978846
    %v148 = vmul.f32 %v136, 0.7978846
    %v149 = vmul.f32 %v139, 0.7978846
    %v150 = vmul.f32 %v128, %v128
    %v151 = vmul.f32 %v131, %v131
    %v152 = vmul.f32 %v136, %v136
    %v153 = vmul.f32 %v139, %v139
    %v154 = vmul.f32 %v150, 0.044715
    %v155 = vmul.f32 %v151, 0.044715
    %v156 = vmul.f32 %v152, 0.044715
    %v157 = vmul.f32 %v153, 0.044715
    %v158 = vadd.f32 %v154, 1.0
    %v159 = vadd.f32 %v155, 1.0
    %v160 = vadd.f32 %v156, 1.0
    %v161 = vadd.f32 %v157, 1.0
    %v162 = vmul.f32 %v146, %v158
    %v163 = vmul.f32 %v147, %v159
    %v164 = vmul.f32 %v148, %v160
    %v165 = vmul.f32 %v149, %v161
    %v166 = vtanh.pop %v162
    %v167 = vtanh.pop %v163
    %v168 = vtanh.pop %v164
    %v169 = vtanh.pop %v165
    %v170 = vadd.f32 %v166, 1.0
    %v171 = vadd.f32 %v167, 1.0
    %v172 = vadd.f32 %v168, 1.0
    %v173 = vadd.f32 %v169, 1.0
    %v174 = vmul.f32 %v142, %v170
    %v175 = vmul.f32 %v143, %v171
    %v176 = vmul.f32 %v144, %v172
    %v177 = vmul.f32 %v145, %v173
    %v178 = vpack.c.bf16 %v175, %v174
    %v179 = vpack.c.bf16 %v177, %v176
    %v182 = vunpack.c.l.b16 %v178
    %v183 = vunpack.c.h.b16 %v178
    %v184 = vunpack.c.l.b16 %v179
    %v185 = vunpack.c.h.b16 %v179
    %v186 = vpack.c.b16 %v182, %v182
    %v187 = vpack.c.b16 %v183, %v183
    %v188 = vpack.c.b16 %v184, %v184
    %v189 = vpack.c.b16 %v185, %v185
    %vm190 = vcmask 1040384
    %vm191 = vcmask 1044484
    %vm192 = vmor %vm190, %vm191
    %v193 = vrot.slane %v186, 7
    %v194 = vrot.slane %v193, 4
    %v195 = vrot.slane %v187, 7
    %v196 = vsel %vm192, %v194, %v195
    %v197 = vrot.slane %v195, 4
    %v198 = vrot.slane %v188, 7
    %v199 = vrot.slane %v198, 4
    %v200 = vrot.slane %v189, 7
    %v201 = vsel %vm192, %v199, %v200
    %v202 = vrot.slane %v200, 4
    %vm209 = vcmask 257025
    %210 = vst.msk [vmem:[#allocation2] sm:$0xe] %vm209, %v193
    %vm211 = vcmask 257024
    %212 = vst.msk [vmem:[#allocation2 + $0x4] sm:$0xf] %vm211, %v196
    %213 = vst.msk [vmem:[#allocation2 + $0x8] sm:$0x1] %vm53, %v197
    %214 = vst.msk [vmem:[#allocation2 + $0xc] sm:$0xe] %vm209, %v198
    %215 = vst.msk [vmem:[#allocation2 + $0x10] sm:$0xf] %vm211, %v201
    %216 = vst.msk [vmem:[#allocation2 + $0x14] sm:$0x1] %vm53, %v202
    %v217 = vld [vmem:[#allocation2] sm:$0xf]
    %v218 = vld [vmem:[#allocation2 + $0x4] sm:$0xf]
    %v219 = vld [vmem:[#allocation2 + $0x8] sm:$0x1]
    %v220 = vld [vmem:[#allocation2 + $0xc] sm:$0xf]
    %v221 = vld [vmem:[#allocation2 + $0x10] sm:$0xf]
    %v222 = vld [vmem:[#allocation2 + $0x14] sm:$0x1]
    %vm223 = vsmask.f32 3328
    %vm224 = vsmask.f32 7440
    %vm225 = vmor %vm223, %vm224
    %v227 = vshrl.u32 %v217, 16
    %v229 = vrot.slane %v227, 4
    %v230 = vshll.u32 %v217, 16
    %v232 = vrot.slane %v230, 5
    %v233 = vor.u32 %v229, %v232
    %v234 = vrot.slane %v233, 4
    %v236 = vshll.u32 %v218, 16
    %v238 = vrot.slane %v236, 5
    %v239 = vsel %vm225, %v234, %v238
    %v240 = vshrl.u32 %v218, 16
    %v242 = vrot.slane %v240, 4
    %v243 = vor.u32 %v242, %v238
    %v244 = vrot.slane %v243, 4
    %v246 = vshll.u32 %v219, 16
    %v248 = vrot.slane %v246, 5
    %v249 = vsel %vm225, %v244, %v248
    %v251 = vshrl.u32 %v220, 16
    %v253 = vrot.slane %v251, 4
    %v254 = vshll.u32 %v220, 16
    %v256 = vrot.slane %v254, 5
    %v257 = vor.u32 %v253, %v256
    %v258 = vrot.slane %v257, 4
    %v260 = vshll.u32 %v221, 16
    %v262 = vrot.slane %v260, 5
    %v263 = vsel %vm225, %v258, %v262
    %v264 = vshrl.u32 %v221, 16
    %v266 = vrot.slane %v264, 4
    %v267 = vor.u32 %v266, %v262
    %v268 = vrot.slane %v267, 4
    %v270 = vshll.u32 %v222, 16
    %v272 = vrot.slane %v270, 5
    %v273 = vsel %vm225, %v268, %v272
    %s274 = scalar_lea.vmem [#allocation3], 16
    %v275 = vld [vmem:[%s274] sm:$0xf]
    %v276 = vld [vmem:[%s274 + $0x4] sm:$0xf]
    %v277 = vld [vmem:[%s274 + $0x8] sm:$0xf]
    %v278 = vld [vmem:[%s274 + $0xc] sm:$0xf]
    %v279 = vld [vmem:[#allocation2] sm:$0xe]
    %v280 = vld [vmem:[#allocation2 + $0xc] sm:$0xe]
    %vm287 = vcmask 1042432
    %vm288 = vcmask 1046532
    %vm289 = vmor %vm287, %vm288
    %v290 = vrot.slane %v279, 5
    %v291 = vrot.slane %v290, 4
    %v292 = vrot.slane %v218, 5
    %v293 = vsel %vm289, %v291, %v292
    %v294 = vrot.slane %v292, 4
    %v295 = vrot.slane %v219, 5
    %v296 = vsel %vm289, %v294, %v295
    %v297 = vrot.slane %v280, 5
    %v298 = vrot.slane %v297, 4
    %v299 = vrot.slane %v221, 5
    %v300 = vsel %vm289, %v298, %v299
    %v301 = vrot.slane %v299, 4
    %v302 = vrot.slane %v222, 5
    %v303 = vsel %vm289, %v301, %v302
    %s304 = scalar_lea.vmem [#allocation3], 32
    %v305 = vld [vmem:[%s304] sm:$0xf]
    %v306 = vld [vmem:[%s304 + $0x4] sm:$0xf]
    %v307 = vld [vmem:[%s304 + $0x8] sm:$0xf]
    %v308 = vld [vmem:[%s304 + $0xc] sm:$0xf]
    %v309 = vunpack.c.l.b16 %v293
    %v310 = vunpack.c.l.b16 %v296
    %v311 = vunpack.c.l.b16 %v300
    %v312 = vunpack.c.l.b16 %v303
    %v313 = vpack.c.b16 %v310, %v309
    %v314 = vpack.c.b16 %v312, %v311
    %v319 = vunpack.c.l.b16 %v305
    %v320 = vunpack.c.l.b16 %v306
    %v321 = vunpack.c.l.b16 %v307
    %v322 = vunpack.c.l.b16 %v308
    %v323 = vpack.c.b16 %v320, %v319
    %v324 = vpack.c.b16 %v322, %v321
    %v328 = vsel %vm86, %v313, 0
    %v331 = vsel %vm86, %v314, 0
    %333 = vmatprep.subr.bf16.mxu0 0
    %334 = vmatpush1.bf16.msra.mxu0 0
    %335 = vmatprep.subr.bf16.mxu0 0
    %336 = vmatpush1.bf16.msra.mxu0 0
    %337 = vmatprep.subr.bf16.mxu0 0
    %338 = vmatpush1.bf16.msra.mxu0 0
    %339 = vmatprep.subr.bf16.mxu0 0
    %340 = vmatpush1.bf16.msra.mxu0 0
    %341 = vmatprep.subr.bf16.mxu0 0
    %342 = vmatpush1.bf16.msra.mxu0 0
    %343 = vmatprep.subr.bf16.mxu0 0
    %344 = vmatpush1.bf16.msra.mxu0 0
    %345 = vmatprep.subr.bf16.mxu0 0
    %346 = vmatpush1.bf16.msra.mxu0 %v324
    %347 = vmatprep.subr.bf16.mxu0 0
    %348 = vmatpush1.bf16.msra.mxu0 %v323
    %349 = vmatprep.subr.bf16.mxu0 0
    %350 = vmatpush2.bf16.msra.mxu0 0
    %351 = vmatprep.subr.bf16.mxu0 0
    %352 = vmatpush2.bf16.msra.mxu0 0
    %353 = vmatprep.subr.bf16.mxu0 0
    %354 = vmatpush2.bf16.msra.mxu0 0
    %355 = vmatprep.subr.bf16.mxu0 0
    %356 = vmatpush2.bf16.msra.mxu0 0
    %357 = vmatprep.subr.bf16.mxu0 0
    %358 = vmatpush2.bf16.msra.mxu0 0
    %359 = vmatprep.subr.bf16.mxu0 0
    %360 = vmatpush2.bf16.msra.mxu0 0
    %361 = vmatprep.subr.bf16.mxu0 0
    %362 = vmatpush2.bf16.msra.mxu0 0
    %363 = vmatprep.subr.bf16.mxu0 0
    %364 = vmatpush2.bf16.msra.mxu0 0
    %365 = vmatprep.mubr.bf16.mxu0 0
    %366 = vmatmul.mubr.bf16.gmra.mxu0 %v328
    %v367 = vpop.f32.mrf.mxu0
    %v368 = vadd.f32 0.0, %v367
    %v369 = vpop.f32.mrf.mxu0
    %v370 = vpop.f32.mrf.mxu0
    %v371 = vadd.f32 0.0, %v370
    %v372 = vpop.f32.mrf.mxu0
    %373 = vmatprep.mubr.bf16.mxu0 0
    %374 = vmatmul.mubr.bf16.gmra.mxu0 %v331
    %v375 = vpop.f32.mrf.mxu0
    %v376 = vadd.f32 0.0, %v375
    %v377 = vpop.f32.mrf.mxu0
    %v378 = vpop.f32.mrf.mxu0
    %v379 = vadd.f32 0.0, %v378
    %v380 = vpop.f32.mrf.mxu0
    %381 = vdwg.mxu0
    %v382 = vunpack.c.l.b16 %v239
    %v383 = vunpack.c.l.b16 %v249
    %v384 = vunpack.c.l.b16 %v263
    %v385 = vunpack.c.l.b16 %v273
    %v386 = vpack.c.b16 %v383, %v382
    %v387 = vpack.c.b16 %v385, %v384
    %v392 = vunpack.c.l.b16 %v275
    %v393 = vunpack.c.l.b16 %v276
    %v394 = vunpack.c.l.b16 %v277
    %v395 = vunpack.c.l.b16 %v278
    %v396 = vpack.c.b16 %v393, %v392
    %v397 = vpack.c.b16 %v395, %v394
    %v401 = vsel %vm86, %v386, 0
    %v404 = vsel %vm86, %v387, 0
    %406 = vmatprep.subr.bf16.mxu0 0
    %407 = vmatpush1.bf16.msra.mxu0 0
    %408 = vmatprep.subr.bf16.mxu0 0
    %409 = vmatpush1.bf16.msra.mxu0 0
    %410 = vmatprep.subr.bf16.mxu0 0
    %411 = vmatpush1.bf16.msra.mxu0 0
    %412 = vmatprep.subr.bf16.mxu0 0
    %413 = vmatpush1.bf16.msra.mxu0 0
    %414 = vmatprep.subr.bf16.mxu0 0
    %415 = vmatpush1.bf16.msra.mxu0 0
    %416 = vmatprep.subr.bf16.mxu0 0
    %417 = vmatpush1.bf16.msra.mxu0 0
    %418 = vmatprep.subr.bf16.mxu0 0
    %419 = vmatpush1.bf16.msra.mxu0 %v397
    %420 = vmatprep.subr.bf16.mxu0 0
    %421 = vmatpush1.bf16.msra.mxu0 %v396
    %422 = vmatprep.subr.bf16.mxu0 0
    %423 = vmatpush2.bf16.msra.mxu0 0
    %424 = vmatprep.subr.bf16.mxu0 0
    %425 = vmatpush2.bf16.msra.mxu0 0
    %426 = vmatprep.subr.bf16.mxu0 0
    %427 = vmatpush2.bf16.msra.mxu0 0
    %428 = vmatprep.subr.bf16.mxu0 0
    %429 = vmatpush2.bf16.msra.mxu0 0
    %430 = vmatprep.subr.bf16.mxu0 0
    %431 = vmatpush2.bf16.msra.mxu0 0
    %432 = vmatprep.subr.bf16.mxu0 0
    %433 = vmatpush2.bf16.msra.mxu0 0
    %434 = vmatprep.subr.bf16.mxu0 0
    %435 = vmatpush2.bf16.msra.mxu0 0
    %436 = vmatprep.subr.bf16.mxu0 0
    %437 = vmatpush2.bf16.msra.mxu0 0
    %438 = vmatprep.mubr.bf16.mxu0 0
    %439 = vmatmul.mubr.bf16.gmra.mxu0 %v401
    %v440 = vpop.f32.mrf.mxu0
    %v441 = vadd.f32 %v368, %v440
    %v442 = vpop.f32.mrf.mxu0
    %v443 = vpop.f32.mrf.mxu0
    %v444 = vadd.f32 %v371, %v443
    %v445 = vpop.f32.mrf.mxu0
    %446 = vmatprep.mubr.bf16.mxu0 0
    %447 = vmatmul.mubr.bf16.gmra.mxu0 %v404
    %v448 = vpop.f32.mrf.mxu0
    %v449 = vadd.f32 %v376, %v448
    %v450 = vpop.f32.mrf.mxu0
    %v451 = vpop.f32.mrf.mxu0
    %v452 = vadd.f32 %v379, %v451
    %v453 = vpop.f32.mrf.mxu0
    %454 = vdwg.mxu0
    %v455 = vld [vmem:[#allocation2 + $0x8] sm:$0x3]
    %v456 = vld [vmem:[#allocation2 + $0x14] sm:$0x3]
    %vm457 = vsmask.f32 2304
    %vm458 = vsmask.f32 6416
    %vm459 = vmor %vm457, %vm458
    %v461 = vshrl.u32 %v279, 16
    %v463 = vrot.slane %v461, 5
    %v464 = vshll.u32 %v279, 16
    %v466 = vrot.slane %v464, 6
    %v467 = vor.u32 %v463, %v466
    %v468 = vrot.slane %v467, 4
    %v469 = vrot.slane %v240, 5
    %v470 = vrot.slane %v236, 6
    %v471 = vor.u32 %v469, %v470
    %v472 = vsel %vm459, %v468, %v471
    %v473 = vrot.slane %v471, 4
    %v475 = vshrl.u32 %v455, 16
    %v477 = vrot.slane %v475, 5
    %v478 = vshll.u32 %v455, 16
    %v480 = vrot.slane %v478, 6
    %v481 = vor.u32 %v477, %v480
    %v482 = vsel %vm459, %v473, %v481
    %v484 = vshrl.u32 %v280, 16
    %v486 = vrot.slane %v484, 5
    %v487 = vshll.u32 %v280, 16
    %v489 = vrot.slane %v487, 6
    %v490 = vor.u32 %v486, %v489
    %v491 = vrot.slane %v490, 4
    %v492 = vrot.slane %v264, 5
    %v493 = vrot.slane %v260, 6
    %v494 = vor.u32 %v492, %v493
    %v495 = vsel %vm459, %v491, %v494
    %v496 = vrot.slane %v494, 4
    %v498 = vshrl.u32 %v456, 16
    %v500 = vrot.slane %v498, 5
    %v501 = vshll.u32 %v456, 16
    %v503 = vrot.slane %v501, 6
    %v504 = vor.u32 %v500, %v503
    %v505 = vsel %vm459, %v496, %v504
    %s506 = scalar_lea.vmem [#allocation3], 48
    %v507 = vld [vmem:[%s506] sm:$0xf]
    %v508 = vld [vmem:[%s506 + $0x4] sm:$0xf]
    %v509 = vld [vmem:[%s506 + $0x8] sm:$0xf]
    %v510 = vld [vmem:[%s506 + $0xc] sm:$0xf]
    %v511 = vunpack.c.l.b16 %v472
    %v512 = vunpack.c.l.b16 %v482
    %v513 = vunpack.c.l.b16 %v495
    %v514 = vunpack.c.l.b16 %v505
    %v515 = vpack.c.b16 %v512, %v511
    %v516 = vpack.c.b16 %v514, %v513
    %v521 = vunpack.c.l.b16 %v507
    %v522 = vunpack.c.l.b16 %v508
    %v523 = vunpack.c.l.b16 %v509
    %v524 = vunpack.c.l.b16 %v510
    %v525 = vpack.c.b16 %v522, %v521
    %v526 = vpack.c.b16 %v524, %v523
    %v530 = vsel %vm86, %v515, 0
    %v533 = vsel %vm86, %v516, 0
    %535 = vmatprep.subr.bf16.mxu0 0
    %536 = vmatpush1.bf16.msra.mxu0 0
    %537 = vmatprep.subr.bf16.mxu0 0
    %538 = vmatpush1.bf16.msra.mxu0 0
    %539 = vmatprep.subr.bf16.mxu0 0
    %540 = vmatpush1.bf16.msra.mxu0 0
    %541 = vmatprep.subr.bf16.mxu0 0
    %542 = vmatpush1.bf16.msra.mxu0 0
    %543 = vmatprep.subr.bf16.mxu0 0
    %544 = vmatpush1.bf16.msra.mxu0 0
    %545 = vmatprep.subr.bf16.mxu0 0
    %546 = vmatpush1.bf16.msra.mxu0 0
    %547 = vmatprep.subr.bf16.mxu0 0
    %548 = vmatpush1.bf16.msra.mxu0 %v526
    %549 = vmatprep.subr.bf16.mxu0 0
    %550 = vmatpush1.bf16.msra.mxu0 %v525
    %551 = vmatprep.subr.bf16.mxu0 0
    %552 = vmatpush2.bf16.msra.mxu0 0
    %553 = vmatprep.subr.bf16.mxu0 0
    %554 = vmatpush2.bf16.msra.mxu0 0
    %555 = vmatprep.subr.bf16.mxu0 0
    %556 = vmatpush2.bf16.msra.mxu0 0
    %557 = vmatprep.subr.bf16.mxu0 0
    %558 = vmatpush2.bf16.msra.mxu0 0
    %559 = vmatprep.subr.bf16.mxu0 0
    %560 = vmatpush2.bf16.msra.mxu0 0
    %561 = vmatprep.subr.bf16.mxu0 0
    %562 = vmatpush2.bf16.msra.mxu0 0
    %563 = vmatprep.subr.bf16.mxu0 0
    %564 = vmatpush2.bf16.msra.mxu0 0
    %565 = vmatprep.subr.bf16.mxu0 0
    %566 = vmatpush2.bf16.msra.mxu0 0
    %567 = vmatprep.mubr.bf16.mxu0 0
    %568 = vmatmul.mubr.bf16.gmra.mxu0 %v530
    %v569 = vpop.f32.mrf.mxu0
    %v570 = vadd.f32 0.0, %v569
    %v571 = vpop.f32.mrf.mxu0
    %v572 = vpop.f32.mrf.mxu0
    %v573 = vadd.f32 0.0, %v572
    %v574 = vpop.f32.mrf.mxu0
    %575 = vmatprep.mubr.bf16.mxu0 0
    %576 = vmatmul.mubr.bf16.gmra.mxu0 %v533
    %v577 = vpop.f32.mrf.mxu0
    %v578 = vadd.f32 0.0, %v577
    %v579 = vpop.f32.mrf.mxu0
    %v580 = vpop.f32.mrf.mxu0
    %v581 = vadd.f32 0.0, %v580
    %v582 = vpop.f32.mrf.mxu0
    %583 = vdwg.mxu0
    %v584 = vadd.f32 %v441, %v570
    %v585 = vadd.f32 %v444, %v573
    %v586 = vadd.f32 %v449, %v578
    %v587 = vadd.f32 %v452, %v581
    %v588 = vld [vmem:[%s6 + $0x1] sm:$0x1]
    %v589 = vlaneseq
    %v590 = vshrl.u32 %v589, 7
    %v591 = vsub.s32 0, %v590
    %v592 = vrot.slane %v588, %v591
    %v593 = vadd.f32 %v584, %v592
    %v594 = vadd.f32 %v585, %v592
    %v595 = vadd.f32 %v586, %v592
    %v596 = vadd.f32 %v587, %v592
    %v597 = vmul.f32 %v593, 0.5
    %v598 = vmul.f32 %v594, 0.5
    %v599 = vmul.f32 %v595, 0.5
    %v600 = vmul.f32 %v596, 0.5
    %v601 = vmul.f32 %v593, 0.7978846
    %v602 = vmul.f32 %v594, 0.7978846
    %v603 = vmul.f32 %v595, 0.7978846
    %v604 = vmul.f32 %v596, 0.7978846
    %v605 = vmul.f32 %v593, %v593
    %v606 = vmul.f32 %v594, %v594
    %v607 = vmul.f32 %v595, %v595
    %v608 = vmul.f32 %v596, %v596
    %v609 = vmul.f32 %v605, 0.044715
    %v610 = vmul.f32 %v606, 0.044715
    %v611 = vmul.f32 %v607, 0.044715
    %v612 = vmul.f32 %v608, 0.044715
    %v613 = vadd.f32 %v609, 1.0
    %v614 = vadd.f32 %v610, 1.0
    %v615 = vadd.f32 %v611, 1.0
    %v616 = vadd.f32 %v612, 1.0
    %v617 = vmul.f32 %v601, %v613
    %v618 = vmul.f32 %v602, %v614
    %v619 = vmul.f32 %v603, %v615
    %v620 = vmul.f32 %v604, %v616
    %v621 = vtanh.pop %v617
    %v622 = vtanh.pop %v618
    %v623 = vtanh.pop %v619
    %v624 = vtanh.pop %v620
    %v625 = vadd.f32 %v621, 1.0
    %v626 = vadd.f32 %v622, 1.0
    %v627 = vadd.f32 %v623, 1.0
    %v628 = vadd.f32 %v624, 1.0
    %v629 = vmul.f32 %v597, %v625
    %v630 = vmul.f32 %v598, %v626
    %v631 = vmul.f32 %v599, %v627
    %v632 = vmul.f32 %v600, %v628
    %v633 = vpack.c.bf16 %v630, %v629
    %v634 = vpack.c.bf16 %v632, %v631
    %v637 = vunpack.c.l.b16 %v633
    %v638 = vunpack.c.h.b16 %v633
    %v639 = vunpack.c.l.b16 %v634
    %v640 = vunpack.c.h.b16 %v634
    %v641 = vpack.c.b16 %v637, %v637
    %v642 = vpack.c.b16 %v638, %v638
    %v643 = vpack.c.b16 %v639, %v639
    %v644 = vpack.c.b16 %v640, %v640
    %v645 = vrot.slane %v641, 7
    %v646 = vrot.slane %v645, 4
    %v647 = vrot.slane %v642, 7
    %v648 = vsel %vm192, %v646, %v647
    %v649 = vrot.slane %v647, 4
    %v650 = vrot.slane %v643, 7
    %v651 = vrot.slane %v650, 4
    %v652 = vrot.slane %v644, 7
    %v653 = vsel %vm192, %v651, %v652
    %v654 = vrot.slane %v652, 4
    %661 = vst.msk [vmem:[#allocation2] sm:$0xe] %vm209, %v645
    %662 = vst.msk [vmem:[#allocation2 + $0x4] sm:$0xf] %vm211, %v648
    %663 = vst.msk [vmem:[#allocation2 + $0x8] sm:$0x1] %vm53, %v649
    %664 = vst.msk [vmem:[#allocation2 + $0xc] sm:$0xe] %vm209, %v650
    %665 = vst.msk [vmem:[#allocation2 + $0x10] sm:$0xf] %vm211, %v653
    %666 = vst.msk [vmem:[#allocation2 + $0x14] sm:$0x1] %vm53, %v654
    %v667 = vld [vmem:[#allocation2] sm:$0xf]
    %v668 = vld [vmem:[#allocation2 + $0x4] sm:$0xf]
    %v669 = vld [vmem:[#allocation2 + $0xc] sm:$0xf]
    %v670 = vld [vmem:[#allocation2 + $0x10] sm:$0xf]
    %s671 = scalar_lea.vmem [#allocation3], 64
    %v672 = vld [vmem:[%s671] sm:$0xf]
    %v673 = vld [vmem:[%s671 + $0x4] sm:$0xf]
    %v674 = vld [vmem:[%s671 + $0x8] sm:$0xf]
    %v675 = vld [vmem:[%s671 + $0xc] sm:$0xf]
    %v676 = vld [vmem:[#allocation2 + $0x8] sm:$0x1]
    %v677 = vld [vmem:[#allocation2 + $0x14] sm:$0x1]
    %v679 = vshrl.u32 %v667, 16
    %v681 = vrot.slane %v679, 4
    %v682 = vshll.u32 %v667, 16
    %v684 = vrot.slane %v682, 5
    %v685 = vor.u32 %v681, %v684
    %v686 = vrot.slane %v685, 4
    %v688 = vshll.u32 %v668, 16
    %v690 = vrot.slane %v688, 5
    %v691 = vsel %vm225, %v686, %v690
    %v692 = vshrl.u32 %v668, 16
    %v694 = vrot.slane %v692, 4
    %v695 = vor.u32 %v694, %v690
    %v696 = vrot.slane %v695, 4
    %v698 = vshll.u32 %v676, 16
    %v700 = vrot.slane %v698, 5
    %v701 = vsel %vm225, %v696, %v700
    %v703 = vshrl.u32 %v669, 16
    %v705 = vrot.slane %v703, 4
    %v706 = vshll.u32 %v669, 16
    %v708 = vrot.slane %v706, 5
    %v709 = vor.u32 %v705, %v708
    %v710 = vrot.slane %v709, 4
    %v712 = vshll.u32 %v670, 16
    %v714 = vrot.slane %v712, 5
    %v715 = vsel %vm225, %v710, %v714
    %v716 = vshrl.u32 %v670, 16
    %v718 = vrot.slane %v716, 4
    %v719 = vor.u32 %v718, %v714
    %v720 = vrot.slane %v719, 4
    %v722 = vshll.u32 %v677, 16
    %v724 = vrot.slane %v722, 5
    %v725 = vsel %vm225, %v720, %v724
    %s726 = scalar_lea.vmem [#allocation3], 80
    %v727 = vld [vmem:[%s726] sm:$0xf]
    %v728 = vld [vmem:[%s726 + $0x4] sm:$0xf]
    %v729 = vld [vmem:[%s726 + $0x8] sm:$0xf]
    %v730 = vld [vmem:[%s726 + $0xc] sm:$0xf]
    %v731 = vunpack.c.l.b16 %v691
    %v732 = vunpack.c.l.b16 %v701
    %v733 = vunpack.c.l.b16 %v715
    %v734 = vunpack.c.l.b16 %v725
    %v735 = vpack.c.b16 %v732, %v731
    %v736 = vpack.c.b16 %v734, %v733
    %v741 = vunpack.c.l.b16 %v727
    %v742 = vunpack.c.l.b16 %v728
    %v743 = vunpack.c.l.b16 %v729
    %v744 = vunpack.c.l.b16 %v730
    %v745 = vpack.c.b16 %v742, %v741
    %v746 = vpack.c.b16 %v744, %v743
    %v750 = vsel %vm86, %v735, 0
    %v753 = vsel %vm86, %v736, 0
    %755 = vmatprep.subr.bf16.mxu0 0
    %756 = vmatpush1.bf16.msra.mxu0 0
    %757 = vmatprep.subr.bf16.mxu0 0
    %758 = vmatpush1.bf16.msra.mxu0 0
    %759 = vmatprep.subr.bf16.mxu0 0
    %760 = vmatpush1.bf16.msra.mxu0 0
    %761 = vmatprep.subr.bf16.mxu0 0
    %762 = vmatpush1.bf16.msra.mxu0 0
    %763 = vmatprep.subr.bf16.mxu0 0
    %764 = vmatpush1.bf16.msra.mxu0 0
    %765 = vmatprep.subr.bf16.mxu0 0
    %766 = vmatpush1.bf16.msra.mxu0 0
    %767 = vmatprep.subr.bf16.mxu0 0
    %768 = vmatpush1.bf16.msra.mxu0 %v746
    %769 = vmatprep.subr.bf16.mxu0 0
    %770 = vmatpush1.bf16.msra.mxu0 %v745
    %771 = vmatprep.subr.bf16.mxu0 0
    %772 = vmatpush2.bf16.msra.mxu0 0
    %773 = vmatprep.subr.bf16.mxu0 0
    %774 = vmatpush2.bf16.msra.mxu0 0
    %775 = vmatprep.subr.bf16.mxu0 0
    %776 = vmatpush2.bf16.msra.mxu0 0
    %777 = vmatprep.subr.bf16.mxu0 0
    %778 = vmatpush2.bf16.msra.mxu0 0
    %779 = vmatprep.subr.bf16.mxu0 0
    %780 = vmatpush2.bf16.msra.mxu0 0
    %781 = vmatprep.subr.bf16.mxu0 0
    %782 = vmatpush2.bf16.msra.mxu0 0
    %783 = vmatprep.subr.bf16.mxu0 0
    %784 = vmatpush2.bf16.msra.mxu0 0
    %785 = vmatprep.subr.bf16.mxu0 0
    %786 = vmatpush2.bf16.msra.mxu0 0
    %787 = vmatprep.mubr.bf16.mxu0 0
    %788 = vmatmul.mubr.bf16.gmra.mxu0 %v750
    %v789 = vpop.f32.mrf.mxu0
    %v790 = vadd.f32 0.0, %v789
    %v791 = vpop.f32.mrf.mxu0
    %v792 = vpop.f32.mrf.mxu0
    %v793 = vadd.f32 0.0, %v792
    %v794 = vpop.f32.mrf.mxu0
    %795 = vmatprep.mubr.bf16.mxu0 0
    %796 = vmatmul.mubr.bf16.gmra.mxu0 %v753
    %v797 = vpop.f32.mrf.mxu0
    %v798 = vadd.f32 0.0, %v797
    %v799 = vpop.f32.mrf.mxu0
    %v800 = vpop.f32.mrf.mxu0
    %v801 = vadd.f32 0.0, %v800
    %v802 = vpop.f32.mrf.mxu0
    %803 = vdwg.mxu0
    %v808 = vunpack.c.l.b16 %v667
    %v809 = vunpack.c.l.b16 %v668
    %v810 = vunpack.c.l.b16 %v669
    %v811 = vunpack.c.l.b16 %v670
    %v812 = vpack.c.b16 %v809, %v808
    %v813 = vpack.c.b16 %v811, %v810
    %v818 = vunpack.c.l.b16 %v672
    %v819 = vunpack.c.l.b16 %v673
    %v820 = vunpack.c.l.b16 %v674
    %v821 = vunpack.c.l.b16 %v675
    %v822 = vpack.c.b16 %v819, %v818
    %v823 = vpack.c.b16 %v821, %v820
    %v827 = vsel %vm86, %v812, 0
    %v830 = vsel %vm86, %v813, 0
    %832 = vmatprep.subr.bf16.mxu0 0
    %833 = vmatpush1.bf16.msra.mxu0 0
    %834 = vmatprep.subr.bf16.mxu0 0
    %835 = vmatpush1.bf16.msra.mxu0 0
    %836 = vmatprep.subr.bf16.mxu0 0
    %837 = vmatpush1.bf16.msra.mxu0 0
    %838 = vmatprep.subr.bf16.mxu0 0
    %839 = vmatpush1.bf16.msra.mxu0 0
    %840 = vmatprep.subr.bf16.mxu0 0
    %841 = vmatpush1.bf16.msra.mxu0 0
    %842 = vmatprep.subr.bf16.mxu0 0
    %843 = vmatpush1.bf16.msra.mxu0 0
    %844 = vmatprep.subr.bf16.mxu0 0
    %845 = vmatpush1.bf16.msra.mxu0 %v823
    %846 = vmatprep.subr.bf16.mxu0 0
    %847 = vmatpush1.bf16.msra.mxu0 %v822
    %848 = vmatprep.subr.bf16.mxu0 0
    %849 = vmatpush2.bf16.msra.mxu0 0
    %850 = vmatprep.subr.bf16.mxu0 0
    %851 = vmatpush2.bf16.msra.mxu0 0
    %852 = vmatprep.subr.bf16.mxu0 0
    %853 = vmatpush2.bf16.msra.mxu0 0
    %854 = vmatprep.subr.bf16.mxu0 0
    %855 = vmatpush2.bf16.msra.mxu0 0
    %856 = vmatprep.subr.bf16.mxu0 0
    %857 = vmatpush2.bf16.msra.mxu0 0
    %858 = vmatprep.subr.bf16.mxu0 0
    %859 = vmatpush2.bf16.msra.mxu0 0
    %860 = vmatprep.subr.bf16.mxu0 0
    %861 = vmatpush2.bf16.msra.mxu0 0
    %862 = vmatprep.subr.bf16.mxu0 0
    %863 = vmatpush2.bf16.msra.mxu0 0
    %864 = vmatprep.mubr.bf16.mxu0 0
    %865 = vmatmul.mubr.bf16.gmra.mxu0 %v827
    %v866 = vpop.f32.mrf.mxu0
    %v867 = vadd.f32 %v790, %v866
    %v868 = vpop.f32.mrf.mxu0
    %v869 = vpop.f32.mrf.mxu0
    %v870 = vadd.f32 %v793, %v869
    %v871 = vpop.f32.mrf.mxu0
    %872 = vmatprep.mubr.bf16.mxu0 0
    %873 = vmatmul.mubr.bf16.gmra.mxu0 %v830
    %v874 = vpop.f32.mrf.mxu0
    %v875 = vadd.f32 %v798, %v874
    %v876 = vpop.f32.mrf.mxu0
    %v877 = vpop.f32.mrf.mxu0
    %v878 = vadd.f32 %v801, %v877
    %v879 = vpop.f32.mrf.mxu0
    %880 = vdwg.mxu0
    %v881 = vld [vmem:[#allocation2] sm:$0xe]
    %v882 = vld [vmem:[#allocation2 + $0xc] sm:$0xe]
    %v887 = vrot.slane %v881, 5
    %v888 = vrot.slane %v887, 4
    %v889 = vrot.slane %v668, 5
    %v890 = vsel %vm289, %v888, %v889
    %v891 = vrot.slane %v889, 4
    %v892 = vrot.slane %v676, 5
    %v893 = vsel %vm289, %v891, %v892
    %v894 = vrot.slane %v882, 5
    %v895 = vrot.slane %v894, 4
    %v896 = vrot.slane %v670, 5
    %v897 = vsel %vm289, %v895, %v896
    %v898 = vrot.slane %v896, 4
    %v899 = vrot.slane %v677, 5
    %v900 = vsel %vm289, %v898, %v899
    %s901 = scalar_lea.vmem [#allocation3], 96
    %v902 = vld [vmem:[%s901] sm:$0xf]
    %v903 = vld [vmem:[%s901 + $0x4] sm:$0xf]
    %v904 = vld [vmem:[%s901 + $0x8] sm:$0xf]
    %v905 = vld [vmem:[%s901 + $0xc] sm:$0xf]
    %v906 = vunpack.c.l.b16 %v890
    %v907 = vunpack.c.l.b16 %v893
    %v908 = vunpack.c.l.b16 %v897
    %v909 = vunpack.c.l.b16 %v900
    %v910 = vpack.c.b16 %v907, %v906
    %v911 = vpack.c.b16 %v909, %v908
    %v916 = vunpack.c.l.b16 %v902
    %v917 = vunpack.c.l.b16 %v903
    %v918 = vunpack.c.l.b16 %v904
    %v919 = vunpack.c.l.b16 %v905
    %v920 = vpack.c.b16 %v917, %v916
    %v921 = vpack.c.b16 %v919, %v918
    %v925 = vsel %vm86, %v910, 0
    %v928 = vsel %vm86, %v911, 0
    %930 = vmatprep.subr.bf16.mxu0 0
    %931 = vmatpush1.bf16.msra.mxu0 0
    %932 = vmatprep.subr.bf16.mxu0 0
    %933 = vmatpush1.bf16.msra.mxu0 0
    %934 = vmatprep.subr.bf16.mxu0 0
    %935 = vmatpush1.bf16.msra.mxu0 0
    %936 = vmatprep.subr.bf16.mxu0 0
    %937 = vmatpush1.bf16.msra.mxu0 0
    %938 = vmatprep.subr.bf16.mxu0 0
    %939 = vmatpush1.bf16.msra.mxu0 0
    %940 = vmatprep.subr.bf16.mxu0 0
    %941 = vmatpush1.bf16.msra.mxu0 0
    %942 = vmatprep.subr.bf16.mxu0 0
    %943 = vmatpush1.bf16.msra.mxu0 %v921
    %944 = vmatprep.subr.bf16.mxu0 0
    %945 = vmatpush1.bf16.msra.mxu0 %v920
    %946 = vmatprep.subr.bf16.mxu0 0
    %947 = vmatpush2.bf16.msra.mxu0 0
    %948 = vmatprep.subr.bf16.mxu0 0
    %949 = vmatpush2.bf16.msra.mxu0 0
    %950 = vmatprep.subr.bf16.mxu0 0
    %951 = vmatpush2.bf16.msra.mxu0 0
    %952 = vmatprep.subr.bf16.mxu0 0
    %953 = vmatpush2.bf16.msra.mxu0 0
    %954 = vmatprep.subr.bf16.mxu0 0
    %955 = vmatpush2.bf16.msra.mxu0 0
    %956 = vmatprep.subr.bf16.mxu0 0
    %957 = vmatpush2.bf16.msra.mxu0 0
    %958 = vmatprep.subr.bf16.mxu0 0
    %959 = vmatpush2.bf16.msra.mxu0 0
    %960 = vmatprep.subr.bf16.mxu0 0
    %961 = vmatpush2.bf16.msra.mxu0 0
    %962 = vmatprep.mubr.bf16.mxu0 0
    %963 = vmatmul.mubr.bf16.gmra.mxu0 %v925
    %v964 = vpop.f32.mrf.mxu0
    %v965 = vadd.f32 0.0, %v964
    %v966 = vpop.f32.mrf.mxu0
    %v967 = vpop.f32.mrf.mxu0
    %v968 = vadd.f32 0.0, %v967
    %v969 = vpop.f32.mrf.mxu0
    %970 = vmatprep.mubr.bf16.mxu0 0
    %971 = vmatmul.mubr.bf16.gmra.mxu0 %v928
    %v972 = vpop.f32.mrf.mxu0
    %v973 = vadd.f32 0.0, %v972
    %v974 = vpop.f32.mrf.mxu0
    %v975 = vpop.f32.mrf.mxu0
    %v976 = vadd.f32 0.0, %v975
    %v977 = vpop.f32.mrf.mxu0
    %978 = vdwg.mxu0
    %v979 = vadd.f32 %v867, %v965
    %v980 = vadd.f32 %v870, %v968
    %v981 = vadd.f32 %v875, %v973
    %v982 = vadd.f32 %v878, %v976
    %v983 = vld [vmem:[#allocation2 + $0x8] sm:$0x3]
    %v984 = vld [vmem:[#allocation2 + $0x14] sm:$0x3]
    %v986 = vshrl.u32 %v881, 16
    %v988 = vrot.slane %v986, 5
    %v989 = vshll.u32 %v881, 16
    %v991 = vrot.slane %v989, 6
    %v992 = vor.u32 %v988, %v991
    %v993 = vrot.slane %v992, 4
    %v994 = vrot.slane %v692, 5
    %v995 = vrot.slane %v688, 6
    %v996 = vor.u32 %v994, %v995
    %v997 = vsel %vm459, %v993, %v996
    %v998 = vrot.slane %v996, 4
    %v1000 = vshrl.u32 %v983, 16
    %v1002 = vrot.slane %v1000, 5
    %v1003 = vshll.u32 %v983, 16
    %v1005 = vrot.slane %v1003, 6
    %v1006 = vor.u32 %v1002, %v1005
    %v1007 = vsel %vm459, %v998, %v1006
    %v1009 = vshrl.u32 %v882, 16
    %v1011 = vrot.slane %v1009, 5
    %v1012 = vshll.u32 %v882, 16
    %v1014 = vrot.slane %v1012, 6
    %v1015 = vor.u32 %v1011, %v1014
    %v1016 = vrot.slane %v1015, 4
    %v1017 = vrot.slane %v716, 5
    %v1018 = vrot.slane %v712, 6
    %v1019 = vor.u32 %v1017, %v1018
    %v1020 = vsel %vm459, %v1016, %v1019
    %v1021 = vrot.slane %v1019, 4
    %v1023 = vshrl.u32 %v984, 16
    %v1025 = vrot.slane %v1023, 5
    %v1026 = vshll.u32 %v984, 16
    %v1028 = vrot.slane %v1026, 6
    %v1029 = vor.u32 %v1025, %v1028
    %v1030 = vsel %vm459, %v1021, %v1029
    %s1031 = scalar_lea.vmem [#allocation3], 112
    %v1032 = vld [vmem:[%s1031] sm:$0xf]
    %v1033 = vld [vmem:[%s1031 + $0x4] sm:$0xf]
    %v1034 = vld [vmem:[%s1031 + $0x8] sm:$0xf]
    %v1035 = vld [vmem:[%s1031 + $0xc] sm:$0xf]
    %v1036 = vunpack.c.l.b16 %v997
    %v1037 = vunpack.c.l.b16 %v1007
    %v1038 = vunpack.c.l.b16 %v1020
    %v1039 = vunpack.c.l.b16 %v1030
    %v1040 = vpack.c.b16 %v1037, %v1036
    %v1041 = vpack.c.b16 %v1039, %v1038
    %v1046 = vunpack.c.l.b16 %v1032
    %v1047 = vunpack.c.l.b16 %v1033
    %v1048 = vunpack.c.l.b16 %v1034
    %v1049 = vunpack.c.l.b16 %v1035
    %v1050 = vpack.c.b16 %v1047, %v1046
    %v1051 = vpack.c.b16 %v1049, %v1048
    %v1055 = vsel %vm86, %v1040, 0
    %v1058 = vsel %vm86, %v1041, 0
    %1060 = vmatprep.subr.bf16.mxu0 0
    %1061 = vmatpush1.bf16.msra.mxu0 0
    %1062 = vmatprep.subr.bf16.mxu0 0
    %1063 = vmatpush1.bf16.msra.mxu0 0
    %1064 = vmatprep.subr.bf16.mxu0 0
    %1065 = vmatpush1.bf16.msra.mxu0 0
    %1066 = vmatprep.subr.bf16.mxu0 0
    %1067 = vmatpush1.bf16.msra.mxu0 0
    %1068 = vmatprep.subr.bf16.mxu0 0
    %1069 = vmatpush1.bf16.msra.mxu0 0
    %1070 = vmatprep.subr.bf16.mxu0 0
    %1071 = vmatpush1.bf16.msra.mxu0 0
    %1072 = vmatprep.subr.bf16.mxu0 0
    %1073 = vmatpush1.bf16.msra.mxu0 %v1051
    %1074 = vmatprep.subr.bf16.mxu0 0
    %1075 = vmatpush1.bf16.msra.mxu0 %v1050
    %1076 = vmatprep.subr.bf16.mxu0 0
    %1077 = vmatpush2.bf16.msra.mxu0 0
    %1078 = vmatprep.subr.bf16.mxu0 0
    %1079 = vmatpush2.bf16.msra.mxu0 0
    %1080 = vmatprep.subr.bf16.mxu0 0
    %1081 = vmatpush2.bf16.msra.mxu0 0
    %1082 = vmatprep.subr.bf16.mxu0 0
    %1083 = vmatpush2.bf16.msra.mxu0 0
    %1084 = vmatprep.subr.bf16.mxu0 0
    %1085 = vmatpush2.bf16.msra.mxu0 0
    %1086 = vmatprep.subr.bf16.mxu0 0
    %1087 = vmatpush2.bf16.msra.mxu0 0
    %1088 = vmatprep.subr.bf16.mxu0 0
    %1089 = vmatpush2.bf16.msra.mxu0 0
    %1090 = vmatprep.subr.bf16.mxu0 0
    %1091 = vmatpush2.bf16.msra.mxu0 0
    %1092 = vmatprep.mubr.bf16.mxu0 0
    %1093 = vmatmul.mubr.bf16.gmra.mxu0 %v1055
    %v1094 = vpop.f32.mrf.mxu0
    %v1095 = vadd.f32 0.0, %v1094
    %v1096 = vpop.f32.mrf.mxu0
    %v1097 = vpop.f32.mrf.mxu0
    %v1098 = vadd.f32 0.0, %v1097
    %v1099 = vpop.f32.mrf.mxu0
    %1100 = vmatprep.mubr.bf16.mxu0 0
    %1101 = vmatmul.mubr.bf16.gmra.mxu0 %v1058
    %v1102 = vpop.f32.mrf.mxu0
    %v1103 = vadd.f32 0.0, %v1102
    %v1104 = vpop.f32.mrf.mxu0
    %v1105 = vpop.f32.mrf.mxu0
    %v1106 = vadd.f32 0.0, %v1105
    %v1107 = vpop.f32.mrf.mxu0
    %1108 = vdwg.mxu0
    %v1109 = vadd.f32 %v979, %v1095
    %v1110 = vadd.f32 %v980, %v1098
    %v1111 = vadd.f32 %v981, %v1103
    %v1112 = vadd.f32 %v982, %v1106
    %v1113 = vld [vmem:[#allocation2] sm:$0xc]
    %v1114 = vld [vmem:[#allocation2 + $0xc] sm:$0xc]
    %vm1119 = vcmask 1041408
    %vm1120 = vcmask 1045508
    %vm1121 = vmor %vm1119, %vm1120
    %v1122 = vrot.slane %v1113, 6
    %v1123 = vrot.slane %v1122, 4
    %v1124 = vrot.slane %v668, 6
    %v1125 = vsel %vm1121, %v1123, %v1124
    %v1126 = vrot.slane %v1124, 4
    %v1127 = vrot.slane %v983, 6
    %v1128 = vsel %vm1121, %v1126, %v1127
    %v1129 = vrot.slane %v1114, 6
    %v1130 = vrot.slane %v1129, 4
    %v1131 = vrot.slane %v670, 6
    %v1132 = vsel %vm1121, %v1130, %v1131
    %v1133 = vrot.slane %v1131, 4
    %v1134 = vrot.slane %v984, 6
    %v1135 = vsel %vm1121, %v1133, %v1134
    %s1136 = scalar_lea.vmem [#allocation3], 128
    %v1137 = vld [vmem:[%s1136] sm:$0xf]
    %v1138 = vld [vmem:[%s1136 + $0x4] sm:$0xf]
    %v1139 = vld [vmem:[%s1136 + $0x8] sm:$0xf]
    %v1140 = vld [vmem:[%s1136 + $0xc] sm:$0xf]
    %v1141 = vunpack.c.l.b16 %v1125
    %v1142 = vunpack.c.l.b16 %v1128
    %v1143 = vunpack.c.l.b16 %v1132
    %v1144 = vunpack.c.l.b16 %v1135
    %v1145 = vpack.c.b16 %v1142, %v1141
    %v1146 = vpack.c.b16 %v1144, %v1143
    %v1151 = vunpack.c.l.b16 %v1137
    %v1152 = vunpack.c.l.b16 %v1138
    %v1153 = vunpack.c.l.b16 %v1139
    %v1154 = vunpack.c.l.b16 %v1140
    %v1155 = vpack.c.b16 %v1152, %v1151
    %v1156 = vpack.c.b16 %v1154, %v1153
    %v1160 = vsel %vm86, %v1145, 0
    %v1163 = vsel %vm86, %v1146, 0
    %1165 = vmatprep.subr.bf16.mxu0 0
    %1166 = vmatpush1.bf16.msra.mxu0 0
    %1167 = vmatprep.subr.bf16.mxu0 0
    %1168 = vmatpush1.bf16.msra.mxu0 0
    %1169 = vmatprep.subr.bf16.mxu0 0
    %1170 = vmatpush1.bf16.msra.mxu0 0
    %1171 = vmatprep.subr.bf16.mxu0 0
    %1172 = vmatpush1.bf16.msra.mxu0 0
    %1173 = vmatprep.subr.bf16.mxu0 0
    %1174 = vmatpush1.bf16.msra.mxu0 0
    %1175 = vmatprep.subr.bf16.mxu0 0
    %1176 = vmatpush1.bf16.msra.mxu0 0
    %1177 = vmatprep.subr.bf16.mxu0 0
    %1178 = vmatpush1.bf16.msra.mxu0 %v1156
    %1179 = vmatprep.subr.bf16.mxu0 0
    %1180 = vmatpush1.bf16.msra.mxu0 %v1155
    %1181 = vmatprep.subr.bf16.mxu0 0
    %1182 = vmatpush2.bf16.msra.mxu0 0
    %1183 = vmatprep.subr.bf16.mxu0 0
    %1184 = vmatpush2.bf16.msra.mxu0 0
    %1185 = vmatprep.subr.bf16.mxu0 0
    %1186 = vmatpush2.bf16.msra.mxu0 0
    %1187 = vmatprep.subr.bf16.mxu0 0
    %1188 = vmatpush2.bf16.msra.mxu0 0
    %1189 = vmatprep.subr.bf16.mxu0 0
    %1190 = vmatpush2.bf16.msra.mxu0 0
    %1191 = vmatprep.subr.bf16.mxu0 0
    %1192 = vmatpush2.bf16.msra.mxu0 0
    %1193 = vmatprep.subr.bf16.mxu0 0
    %1194 = vmatpush2.bf16.msra.mxu0 0
    %1195 = vmatprep.subr.bf16.mxu0 0
    %1196 = vmatpush2.bf16.msra.mxu0 0
    %1197 = vmatprep.mubr.bf16.mxu0 0
    %1198 = vmatmul.mubr.bf16.gmra.mxu0 %v1160
    %v1199 = vpop.f32.mrf.mxu0
    %v1200 = vadd.f32 0.0, %v1199
    %v1201 = vpop.f32.mrf.mxu0
    %v1202 = vpop.f32.mrf.mxu0
    %v1203 = vadd.f32 0.0, %v1202
    %v1204 = vpop.f32.mrf.mxu0
    %1205 = vmatprep.mubr.bf16.mxu0 0
    %1206 = vmatmul.mubr.bf16.gmra.mxu0 %v1163
    %v1207 = vpop.f32.mrf.mxu0
    %v1208 = vadd.f32 0.0, %v1207
    %v1209 = vpop.f32.mrf.mxu0
    %v1210 = vpop.f32.mrf.mxu0
    %v1211 = vadd.f32 0.0, %v1210
    %v1212 = vpop.f32.mrf.mxu0
    %1213 = vdwg.mxu0
    %v1214 = vadd.f32 %v1109, %v1200
    %v1215 = vadd.f32 %v1110, %v1203
    %v1216 = vadd.f32 %v1111, %v1208
    %v1217 = vadd.f32 %v1112, %v1211
    %v1218 = vld [vmem:[%s6 + $0x2] sm:$0x1]
    %v1219 = vlaneseq
    %v1220 = vshrl.u32 %v1219, 7
    %v1221 = vsub.s32 0, %v1220
    %v1222 = vrot.slane %v1218, %v1221
    %v1223 = vadd.f32 %v1214, %v1222
    %v1224 = vadd.f32 %v1215, %v1222
    %v1225 = vadd.f32 %v1216, %v1222
    %v1226 = vadd.f32 %v1217, %v1222
    %v1227 = vmul.f32 %v1223, 0.5
    %v1228 = vmul.f32 %v1224, 0.5
    %v1229 = vmul.f32 %v1225, 0.5
    %v1230 = vmul.f32 %v1226, 0.5
    %v1231 = vmul.f32 %v1223, 0.7978846
    %v1232 = vmul.f32 %v1224, 0.7978846
    %v1233 = vmul.f32 %v1225, 0.7978846
    %v1234 = vmul.f32 %v1226, 0.7978846
    %v1235 = vmul.f32 %v1223, %v1223
    %v1236 = vmul.f32 %v1224, %v1224
    %v1237 = vmul.f32 %v1225, %v1225
    %v1238 = vmul.f32 %v1226, %v1226
    %v1239 = vmul.f32 %v1235, 0.044715
    %v1240 = vmul.f32 %v1236, 0.044715
    %v1241 = vmul.f32 %v1237, 0.044715
    %v1242 = vmul.f32 %v1238, 0.044715
    %v1243 = vadd.f32 %v1239, 1.0
    %v1244 = vadd.f32 %v1240, 1.0
    %v1245 = vadd.f32 %v1241, 1.0
    %v1246 = vadd.f32 %v1242, 1.0
    %v1247 = vmul.f32 %v1231, %v1243
    %v1248 = vmul.f32 %v1232, %v1244
    %v1249 = vmul.f32 %v1233, %v1245
    %v1250 = vmul.f32 %v1234, %v1246
    %v1251 = vtanh.pop %v1247
    %v1252 = vtanh.pop %v1248
    %v1253 = vtanh.pop %v1249
    %v1254 = vtanh.pop %v1250
    %v1255 = vadd.f32 %v1251, 1.0
    %v1256 = vadd.f32 %v1252, 1.0
    %v1257 = vadd.f32 %v1253, 1.0
    %v1258 = vadd.f32 %v1254, 1.0
    %v1259 = vmul.f32 %v1227, %v1255
    %v1260 = vmul.f32 %v1228, %v1256
    %v1261 = vmul.f32 %v1229, %v1257
    %v1262 = vmul.f32 %v1230, %v1258
    %v1263 = vpack.c.bf16 %v1260, %v1259
    %v1264 = vpack.c.bf16 %v1262, %v1261
    %v1267 = vunpack.c.l.b16 %v1263
    %v1268 = vunpack.c.h.b16 %v1263
    %v1269 = vunpack.c.l.b16 %v1264
    %v1270 = vunpack.c.h.b16 %v1264
    %v1271 = vpack.c.b16 %v1267, %v1267
    %v1272 = vpack.c.b16 %v1268, %v1268
    %v1273 = vpack.c.b16 %v1269, %v1269
    %v1274 = vpack.c.b16 %v1270, %v1270
    %v1275 = vrot.slane %v1271, 7
    %v1276 = vrot.slane %v1275, 4
    %v1277 = vrot.slane %v1272, 7
    %v1278 = vsel %vm192, %v1276, %v1277
    %v1279 = vrot.slane %v1277, 4
    %v1280 = vrot.slane %v1273, 7
    %v1281 = vrot.slane %v1280, 4
    %v1282 = vrot.slane %v1274, 7
    %v1283 = vsel %vm192, %v1281, %v1282
    %v1284 = vrot.slane %v1282, 4
    %1291 = vst.msk [vmem:[#allocation2] sm:$0xe] %vm209, %v1275
    %1292 = vst.msk [vmem:[#allocation2 + $0x4] sm:$0xf] %vm211, %v1278
    %1293 = vst.msk [vmem:[#allocation2 + $0x8] sm:$0x1] %vm53, %v1279
    %1294 = vst.msk [vmem:[#allocation2 + $0xc] sm:$0xe] %vm209, %v1280
    %1295 = vst.msk [vmem:[#allocation2 + $0x10] sm:$0xf] %vm211, %v1283
    %1296 = vst.msk [vmem:[#allocation2 + $0x14] sm:$0x1] %vm53, %v1284
    %v1297 = vld [vmem:[#allocation2] sm:$0xf]
    %v1298 = vld [vmem:[#allocation2 + $0x4] sm:$0xf]
    %v1299 = vld [vmem:[#allocation2 + $0x8] sm:$0x1]
    %v1300 = vld [vmem:[#allocation2 + $0xc] sm:$0xf]
    %v1301 = vld [vmem:[#allocation2 + $0x10] sm:$0xf]
    %v1302 = vld [vmem:[#allocation2 + $0x14] sm:$0x1]
    %v1304 = vshrl.u32 %v1297, 16
    %v1306 = vrot.slane %v1304, 4
    %v1307 = vshll.u32 %v1297, 16
    %v1309 = vrot.slane %v1307, 5
    %v1310 = vor.u32 %v1306, %v1309
    %v1311 = vrot.slane %v1310, 4
    %v1313 = vshll.u32 %v1298, 16
    %v1315 = vrot.slane %v1313, 5
    %v1316 = vsel %vm225, %v1311, %v1315
    %v1317 = vshrl.u32 %v1298, 16
    %v1319 = vrot.slane %v1317, 4
    %v1320 = vor.u32 %v1319, %v1315
    %v1321 = vrot.slane %v1320, 4
    %v1323 = vshll.u32 %v1299, 16
    %v1325 = vrot.slane %v1323, 5
    %v1326 = vsel %vm225, %v1321, %v1325
    %v1328 = vshrl.u32 %v1300, 16
    %v1330 = vrot.slane %v1328, 4
    %v1331 = vshll.u32 %v1300, 16
    %v1333 = vrot.slane %v1331, 5
    %v1334 = vor.u32 %v1330, %v1333
    %v1335 = vrot.slane %v1334, 4
    %v1337 = vshll.u32 %v1301, 16
    %v1339 = vrot.slane %v1337, 5
    %v1340 = vsel %vm225, %v1335, %v1339
    %v1341 = vshrl.u32 %v1301, 16
    %v1343 = vrot.slane %v1341, 4
    %v1344 = vor.u32 %v1343, %v1339
    %v1345 = vrot.slane %v1344, 4
    %v1347 = vshll.u32 %v1302, 16
    %v1349 = vrot.slane %v1347, 5
    %v1350 = vsel %vm225, %v1345, %v1349
    %s1351 = scalar_lea.vmem [#allocation3], 144
    %v1352 = vld [vmem:[%s1351] sm:$0xf]
    %v1353 = vld [vmem:[%s1351 + $0x4] sm:$0xf]
    %v1354 = vld [vmem:[%s1351 + $0x8] sm:$0xf]
    %v1355 = vld [vmem:[%s1351 + $0xc] sm:$0xf]
    %v1356 = vld [vmem:[#allocation2] sm:$0xe]
    %v1357 = vld [vmem:[#allocation2 + $0xc] sm:$0xe]
    %v1364 = vrot.slane %v1356, 5
    %v1365 = vrot.slane %v1364, 4
    %v1366 = vrot.slane %v1298, 5
    %v1367 = vsel %vm289, %v1365, %v1366
    %v1368 = vrot.slane %v1366, 4
    %v1369 = vrot.slane %v1299, 5
    %v1370 = vsel %vm289, %v1368, %v1369
    %v1371 = vrot.slane %v1357, 5
    %v1372 = vrot.slane %v1371, 4
    %v1373 = vrot.slane %v1301, 5
    %v1374 = vsel %vm289, %v1372, %v1373
    %v1375 = vrot.slane %v1373, 4
    %v1376 = vrot.slane %v1302, 5
    %v1377 = vsel %vm289, %v1375, %v1376
    %s1378 = scalar_lea.vmem [#allocation3], 160
    %v1379 = vld [vmem:[%s1378] sm:$0xf]
    %v1380 = vld [vmem:[%s1378 + $0x4] sm:$0xf]
    %v1381 = vld [vmem:[%s1378 + $0x8] sm:$0xf]
    %v1382 = vld [vmem:[%s1378 + $0xc] sm:$0xf]
    %v1383 = vunpack.c.l.b16 %v1367
    %v1384 = vunpack.c.l.b16 %v1370
    %v1385 = vunpack.c.l.b16 %v1374
    %v1386 = vunpack.c.l.b16 %v1377
    %v1387 = vpack.c.b16 %v1384, %v1383
    %v1388 = vpack.c.b16 %v1386, %v1385
    %v1393 = vunpack.c.l.b16 %v1379
    %v1394 = vunpack.c.l.b16 %v1380
    %v1395 = vunpack.c.l.b16 %v1381
    %v1396 = vunpack.c.l.b16 %v1382
    %v1397 = vpack.c.b16 %v1394, %v1393
    %v1398 = vpack.c.b16 %v1396, %v1395
    %v1402 = vsel %vm86, %v1387, 0
    %v1405 = vsel %vm86, %v1388, 0
    %1407 = vmatprep.subr.bf16.mxu0 0
    %1408 = vmatpush1.bf16.msra.mxu0 0
    %1409 = vmatprep.subr.bf16.mxu0 0
    %1410 = vmatpush1.bf16.msra.mxu0 0
    %1411 = vmatprep.subr.bf16.mxu0 0
    %1412 = vmatpush1.bf16.msra.mxu0 0
    %1413 = vmatprep.subr.bf16.mxu0 0
    %1414 = vmatpush1.bf16.msra.mxu0 0
    %1415 = vmatprep.subr.bf16.mxu0 0
    %1416 = vmatpush1.bf16.msra.mxu0 0
    %1417 = vmatprep.subr.bf16.mxu0 0
    %1418 = vmatpush1.bf16.msra.mxu0 0
    %1419 = vmatprep.subr.bf16.mxu0 0
    %1420 = vmatpush1.bf16.msra.mxu0 %v1398
    %1421 = vmatprep.subr.bf16.mxu0 0
    %1422 = vmatpush1.bf16.msra.mxu0 %v1397
    %1423 = vmatprep.subr.bf16.mxu0 0
    %1424 = vmatpush2.bf16.msra.mxu0 0
    %1425 = vmatprep.subr.bf16.mxu0 0
    %1426 = vmatpush2.bf16.msra.mxu0 0
    %1427 = vmatprep.subr.bf16.mxu0 0
    %1428 = vmatpush2.bf16.msra.mxu0 0
    %1429 = vmatprep.subr.bf16.mxu0 0
    %1430 = vmatpush2.bf16.msra.mxu0 0
    %1431 = vmatprep.subr.bf16.mxu0 0
    %1432 = vmatpush2.bf16.msra.mxu0 0
    %1433 = vmatprep.subr.bf16.mxu0 0
    %1434 = vmatpush2.bf16.msra.mxu0 0
    %1435 = vmatprep.subr.bf16.mxu0 0
    %1436 = vmatpush2.bf16.msra.mxu0 0
    %1437 = vmatprep.subr.bf16.mxu0 0
    %1438 = vmatpush2.bf16.msra.mxu0 0
    %1439 = vmatprep.mubr.bf16.mxu0 0
    %1440 = vmatmul.mubr.bf16.gmra.mxu0 %v1402
    %v1441 = vpop.f32.mrf.mxu0
    %v1442 = vadd.f32 0.0, %v1441
    %v1443 = vpop.f32.mrf.mxu0
    %v1444 = vpop.f32.mrf.mxu0
    %v1445 = vadd.f32 0.0, %v1444
    %v1446 = vpop.f32.mrf.mxu0
    %1447 = vmatprep.mubr.bf16.mxu0 0
    %1448 = vmatmul.mubr.bf16.gmra.mxu0 %v1405
    %v1449 = vpop.f32.mrf.mxu0
    %v1450 = vadd.f32 0.0, %v1449
    %v1451 = vpop.f32.mrf.mxu0
    %v1452 = vpop.f32.mrf.mxu0
    %v1453 = vadd.f32 0.0, %v1452
    %v1454 = vpop.f32.mrf.mxu0
    %1455 = vdwg.mxu0
    %v1456 = vunpack.c.l.b16 %v1316
    %v1457 = vunpack.c.l.b16 %v1326
    %v1458 = vunpack.c.l.b16 %v1340
    %v1459 = vunpack.c.l.b16 %v1350
    %v1460 = vpack.c.b16 %v1457, %v1456
    %v1461 = vpack.c.b16 %v1459, %v1458
    %v1466 = vunpack.c.l.b16 %v1352
    %v1467 = vunpack.c.l.b16 %v1353
    %v1468 = vunpack.c.l.b16 %v1354
    %v1469 = vunpack.c.l.b16 %v1355
    %v1470 = vpack.c.b16 %v1467, %v1466
    %v1471 = vpack.c.b16 %v1469, %v1468
    %v1475 = vsel %vm86, %v1460, 0
    %v1478 = vsel %vm86, %v1461, 0
    %1480 = vmatprep.subr.bf16.mxu0 0
    %1481 = vmatpush1.bf16.msra.mxu0 0
    %1482 = vmatprep.subr.bf16.mxu0 0
    %1483 = vmatpush1.bf16.msra.mxu0 0
    %1484 = vmatprep.subr.bf16.mxu0 0
    %1485 = vmatpush1.bf16.msra.mxu0 0
    %1486 = vmatprep.subr.bf16.mxu0 0
    %1487 = vmatpush1.bf16.msra.mxu0 0
    %1488 = vmatprep.subr.bf16.mxu0 0
    %1489 = vmatpush1.bf16.msra.mxu0 0
    %1490 = vmatprep.subr.bf16.mxu0 0
    %1491 = vmatpush1.bf16.msra.mxu0 0
    %1492 = vmatprep.subr.bf16.mxu0 0
    %1493 = vmatpush1.bf16.msra.mxu0 %v1471
    %1494 = vmatprep.subr.bf16.mxu0 0
    %1495 = vmatpush1.bf16.msra.mxu0 %v1470
    %1496 = vmatprep.subr.bf16.mxu0 0
    %1497 = vmatpush2.bf16.msra.mxu0 0
    %1498 = vmatprep.subr.bf16.mxu0 0
    %1499 = vmatpush2.bf16.msra.mxu0 0
    %1500 = vmatprep.subr.bf16.mxu0 0
    %1501 = vmatpush2.bf16.msra.mxu0 0
    %1502 = vmatprep.subr.bf16.mxu0 0
    %1503 = vmatpush2.bf16.msra.mxu0 0
    %1504 = vmatprep.subr.bf16.mxu0 0
    %1505 = vmatpush2.bf16.msra.mxu0 0
    %1506 = vmatprep.subr.bf16.mxu0 0
    %1507 = vmatpush2.bf16.msra.mxu0 0
    %1508 = vmatprep.subr.bf16.mxu0 0
    %1509 = vmatpush2.bf16.msra.mxu0 0
    %1510 = vmatprep.subr.bf16.mxu0 0
    %1511 = vmatpush2.bf16.msra.mxu0 0
    %1512 = vmatprep.mubr.bf16.mxu0 0
    %1513 = vmatmul.mubr.bf16.gmra.mxu0 %v1475
    %v1514 = vpop.f32.mrf.mxu0
    %v1515 = vadd.f32 %v1442, %v1514
    %v1516 = vpop.f32.mrf.mxu0
    %v1517 = vpop.f32.mrf.mxu0
    %v1518 = vadd.f32 %v1445, %v1517
    %v1519 = vpop.f32.mrf.mxu0
    %1520 = vmatprep.mubr.bf16.mxu0 0
    %1521 = vmatmul.mubr.bf16.gmra.mxu0 %v1478
    %v1522 = vpop.f32.mrf.mxu0
    %v1523 = vadd.f32 %v1450, %v1522
    %v1524 = vpop.f32.mrf.mxu0
    %v1525 = vpop.f32.mrf.mxu0
    %v1526 = vadd.f32 %v1453, %v1525
    %v1527 = vpop.f32.mrf.mxu0
    %1528 = vdwg.mxu0
    %v1529 = vld [vmem:[#allocation2 + $0x8] sm:$0x3]
    %v1530 = vld [vmem:[#allocation2 + $0x14] sm:$0x3]
    %v1532 = vshrl.u32 %v1356, 16
    %v1534 = vrot.slane %v1532, 5
    %v1535 = vshll.u32 %v1356, 16
    %v1537 = vrot.slane %v1535, 6
    %v1538 = vor.u32 %v1534, %v1537
    %v1539 = vrot.slane %v1538, 4
    %v1540 = vrot.slane %v1317, 5
    %v1541 = vrot.slane %v1313, 6
    %v1542 = vor.u32 %v1540, %v1541
    %v1543 = vsel %vm459, %v1539, %v1542
    %v1544 = vrot.slane %v1542, 4
    %v1546 = vshrl.u32 %v1529, 16
    %v1548 = vrot.slane %v1546, 5
    %v1549 = vshll.u32 %v1529, 16
    %v1551 = vrot.slane %v1549, 6
    %v1552 = vor.u32 %v1548, %v1551
    %v1553 = vsel %vm459, %v1544, %v1552
    %v1555 = vshrl.u32 %v1357, 16
    %v1557 = vrot.slane %v1555, 5
    %v1558 = vshll.u32 %v1357, 16
    %v1560 = vrot.slane %v1558, 6
    %v1561 = vor.u32 %v1557, %v1560
    %v1562 = vrot.slane %v1561, 4
    %v1563 = vrot.slane %v1341, 5
    %v1564 = vrot.slane %v1337, 6
    %v1565 = vor.u32 %v1563, %v1564
    %v1566 = vsel %vm459, %v1562, %v1565
    %v1567 = vrot.slane %v1565, 4
    %v1569 = vshrl.u32 %v1530, 16
    %v1571 = vrot.slane %v1569, 5
    %v1572 = vshll.u32 %v1530, 16
    %v1574 = vrot.slane %v1572, 6
    %v1575 = vor.u32 %v1571, %v1574
    %v1576 = vsel %vm459, %v1567, %v1575
    %s1577 = scalar_lea.vmem [#allocation3], 176
    %v1578 = vld [vmem:[%s1577] sm:$0xf]
    %v1579 = vld [vmem:[%s1577 + $0x4] sm:$0xf]
    %v1580 = vld [vmem:[%s1577 + $0x8] sm:$0xf]
    %v1581 = vld [vmem:[%s1577 + $0xc] sm:$0xf]
    %v1582 = vunpack.c.l.b16 %v1543
    %v1583 = vunpack.c.l.b16 %v1553
    %v1584 = vunpack.c.l.b16 %v1566
    %v1585 = vunpack.c.l.b16 %v1576
    %v1586 = vpack.c.b16 %v1583, %v1582
    %v1587 = vpack.c.b16 %v1585, %v1584
    %v1592 = vunpack.c.l.b16 %v1578
    %v1593 = vunpack.c.l.b16 %v1579
    %v1594 = vunpack.c.l.b16 %v1580
    %v1595 = vunpack.c.l.b16 %v1581
    %v1596 = vpack.c.b16 %v1593, %v1592
    %v1597 = vpack.c.b16 %v1595, %v1594
    %v1601 = vsel %vm86, %v1586, 0
    %v1604 = vsel %vm86, %v1587, 0
    %1606 = vmatprep.subr.bf16.mxu0 0
    %1607 = vmatpush1.bf16.msra.mxu0 0
    %1608 = vmatprep.subr.bf16.mxu0 0
    %1609 = vmatpush1.bf16.msra.mxu0 0
    %1610 = vmatprep.subr.bf16.mxu0 0
    %1611 = vmatpush1.bf16.msra.mxu0 0
    %1612 = vmatprep.subr.bf16.mxu0 0
    %1613 = vmatpush1.bf16.msra.mxu0 0
    %1614 = vmatprep.subr.bf16.mxu0 0
    %1615 = vmatpush1.bf16.msra.mxu0 0
    %1616 = vmatprep.subr.bf16.mxu0 0
    %1617 = vmatpush1.bf16.msra.mxu0 0
    %1618 = vmatprep.subr.bf16.mxu0 0
    %1619 = vmatpush1.bf16.msra.mxu0 %v1597
    %1620 = vmatprep.subr.bf16.mxu0 0
    %1621 = vmatpush1.bf16.msra.mxu0 %v1596
    %1622 = vmatprep.subr.bf16.mxu0 0
    %1623 = vmatpush2.bf16.msra.mxu0 0
    %1624 = vmatprep.subr.bf16.mxu0 0
    %1625 = vmatpush2.bf16.msra.mxu0 0
    %1626 = vmatprep.subr.bf16.mxu0 0
    %1627 = vmatpush2.bf16.msra.mxu0 0
    %1628 = vmatprep.subr.bf16.mxu0 0
    %1629 = vmatpush2.bf16.msra.mxu0 0
    %1630 = vmatprep.subr.bf16.mxu0 0
    %1631 = vmatpush2.bf16.msra.mxu0 0
    %1632 = vmatprep.subr.bf16.mxu0 0
    %1633 = vmatpush2.bf16.msra.mxu0 0
    %1634 = vmatprep.subr.bf16.mxu0 0
    %1635 = vmatpush2.bf16.msra.mxu0 0
    %1636 = vmatprep.subr.bf16.mxu0 0
    %1637 = vmatpush2.bf16.msra.mxu0 0
    %1638 = vmatprep.mubr.bf16.mxu0 0
    %1639 = vmatmul.mubr.bf16.gmra.mxu0 %v1601
    %v1640 = vpop.f32.mrf.mxu0
    %v1641 = vadd.f32 0.0, %v1640
    %v1642 = vpop.f32.mrf.mxu0
    %v1643 = vpop.f32.mrf.mxu0
    %v1644 = vadd.f32 0.0, %v1643
    %v1645 = vpop.f32.mrf.mxu0
    %1646 = vmatprep.mubr.bf16.mxu0 0
    %1647 = vmatmul.mubr.bf16.gmra.mxu0 %v1604
    %v1648 = vpop.f32.mrf.mxu0
    %v1649 = vadd.f32 0.0, %v1648
    %v1650 = vpop.f32.mrf.mxu0
    %v1651 = vpop.f32.mrf.mxu0
    %v1652 = vadd.f32 0.0, %v1651
    %v1653 = vpop.f32.mrf.mxu0
    %1654 = vdwg.mxu0
    %v1655 = vadd.f32 %v1515, %v1641
    %v1656 = vadd.f32 %v1518, %v1644
    %v1657 = vadd.f32 %v1523, %v1649
    %v1658 = vadd.f32 %v1526, %v1652
    %v1659 = vld [vmem:[%s6 + $0x3] sm:$0x1]
    %v1660 = vlaneseq
    %v1661 = vshrl.u32 %v1660, 7
    %v1662 = vsub.s32 0, %v1661
    %v1663 = vrot.slane %v1659, %v1662
    %v1664 = vadd.f32 %v1655, %v1663
    %v1665 = vadd.f32 %v1656, %v1663
    %v1666 = vadd.f32 %v1657, %v1663
    %v1667 = vadd.f32 %v1658, %v1663
    %v1668 = vmul.f32 %v1664, 0.5
    %v1669 = vmul.f32 %v1665, 0.5
    %v1670 = vmul.f32 %v1666, 0.5
    %v1671 = vmul.f32 %v1667, 0.5
    %v1672 = vmul.f32 %v1664, 0.7978846
    %v1673 = vmul.f32 %v1665, 0.7978846
    %v1674 = vmul.f32 %v1666, 0.7978846
    %v1675 = vmul.f32 %v1667, 0.7978846
    %v1676 = vmul.f32 %v1664, %v1664
    %v1677 = vmul.f32 %v1665, %v1665
    %v1678 = vmul.f32 %v1666, %v1666
    %v1679 = vmul.f32 %v1667, %v1667
    %v1680 = vmul.f32 %v1676, 0.044715
    %v1681 = vmul.f32 %v1677, 0.044715
    %v1682 = vmul.f32 %v1678, 0.044715
    %v1683 = vmul.f32 %v1679, 0.044715
    %v1684 = vadd.f32 %v1680, 1.0
    %v1685 = vadd.f32 %v1681, 1.0
    %v1686 = vadd.f32 %v1682, 1.0
    %v1687 = vadd.f32 %v1683, 1.0
    %v1688 = vmul.f32 %v1672, %v1684
    %v1689 = vmul.f32 %v1673, %v1685
    %v1690 = vmul.f32 %v1674, %v1686
    %v1691 = vmul.f32 %v1675, %v1687
    %v1692 = vtanh.pop %v1688
    %v1693 = vtanh.pop %v1689
    %v1694 = vtanh.pop %v1690
    %v1695 = vtanh.pop %v1691
    %v1696 = vadd.f32 %v1692, 1.0
    %v1697 = vadd.f32 %v1693, 1.0
    %v1698 = vadd.f32 %v1694, 1.0
    %v1699 = vadd.f32 %v1695, 1.0
    %v1700 = vmul.f32 %v1668, %v1696
    %v1701 = vmul.f32 %v1669, %v1697
    %v1702 = vmul.f32 %v1670, %v1698
    %v1703 = vmul.f32 %v1671, %v1699
    %v1704 = vpack.c.bf16 %v1701, %v1700
    %v1705 = vpack.c.bf16 %v1703, %v1702
    %v1706 = vld [vmem:[%s2] sm:$0xf]
    %v1707 = vld [vmem:[%s2 + $0x4] sm:$0xf]
    %v1708 = vld [vmem:[%s2 + $0x8] sm:$0xf]
    %v1709 = vld [vmem:[%s2 + $0xc] sm:$0xf]
    %v1710 = vld [vmem:[%s6 + $0x4] sm:$0x1]
    %v1711 = vlaneseq
    %v1712 = vshrl.u32 %v1711, 7
    %v1713 = vsub.s32 0, %v1712
    %v1714 = vrot.slane %v1710, %v1713
    %v1719 = vunpack.c.l.b16 %v1706
    %v1720 = vunpack.c.l.b16 %v1707
    %v1721 = vunpack.c.l.b16 %v1708
    %v1722 = vunpack.c.l.b16 %v1709
    %v1723 = vpack.c.b16 %v1720, %v1719
    %v1724 = vpack.c.b16 %v1722, %v1721
    %v1728 = vsel %vm86, %v1704, 0
    %v1731 = vsel %vm86, %v1705, 0
    %1733 = vmatprep.subr.bf16.mxu0 0
    %1734 = vmatpush1.bf16.msra.mxu0 0
    %1735 = vmatprep.subr.bf16.mxu0 0
    %1736 = vmatpush1.bf16.msra.mxu0 0
    %1737 = vmatprep.subr.bf16.mxu0 0
    %1738 = vmatpush1.bf16.msra.mxu0 0
    %1739 = vmatprep.subr.bf16.mxu0 0
    %1740 = vmatpush1.bf16.msra.mxu0 0
    %1741 = vmatprep.subr.bf16.mxu0 0
    %1742 = vmatpush1.bf16.msra.mxu0 0
    %1743 = vmatprep.subr.bf16.mxu0 0
    %1744 = vmatpush1.bf16.msra.mxu0 0
    %1745 = vmatprep.subr.bf16.mxu0 0
    %1746 = vmatpush1.bf16.msra.mxu0 %v1724
    %1747 = vmatprep.subr.bf16.mxu0 0
    %1748 = vmatpush1.bf16.msra.mxu0 %v1723
    %1749 = vmatprep.subr.bf16.mxu0 0
    %1750 = vmatpush2.bf16.msra.mxu0 0
    %1751 = vmatprep.subr.bf16.mxu0 0
    %1752 = vmatpush2.bf16.msra.mxu0 0
    %1753 = vmatprep.subr.bf16.mxu0 0
    %1754 = vmatpush2.bf16.msra.mxu0 0
    %1755 = vmatprep.subr.bf16.mxu0 0
    %1756 = vmatpush2.bf16.msra.mxu0 0
    %1757 = vmatprep.subr.bf16.mxu0 0
    %1758 = vmatpush2.bf16.msra.mxu0 0
    %1759 = vmatprep.subr.bf16.mxu0 0
    %1760 = vmatpush2.bf16.msra.mxu0 0
    %1761 = vmatprep.subr.bf16.mxu0 0
    %1762 = vmatpush2.bf16.msra.mxu0 0
    %1763 = vmatprep.subr.bf16.mxu0 0
    %1764 = vmatpush2.bf16.msra.mxu0 0
    %1765 = vmatprep.mubr.bf16.mxu0 0
    %1766 = vmatmul.mubr.bf16.gmra.mxu0 %v1728
    %v1767 = vpop.f32.mrf.mxu0
    %v1768 = vadd.f32 %v1714, %v1767
    %v1769 = vpop.f32.mrf.mxu0
    %v1770 = vpop.f32.mrf.mxu0
    %v1771 = vadd.f32 %v1714, %v1770
    %v1772 = vpop.f32.mrf.mxu0
    %1773 = vmatprep.mubr.bf16.mxu0 0
    %1774 = vmatmul.mubr.bf16.gmra.mxu0 %v1731
    %v1775 = vpop.f32.mrf.mxu0
    %v1776 = vadd.f32 %v1714, %v1775
    %v1777 = vpop.f32.mrf.mxu0
    %v1778 = vpop.f32.mrf.mxu0
    %v1779 = vadd.f32 %v1714, %v1778
    %v1780 = vpop.f32.mrf.mxu0
    %1781 = vdwg.mxu0
    %v1782 = vmul.f32 %v1768, 0.5
    %v1783 = vmul.f32 %v1771, 0.5
    %v1784 = vmul.f32 %v1776, 0.5
    %v1785 = vmul.f32 %v1779, 0.5
    %v1786 = vmul.f32 %v1768, 0.7978846
    %v1787 = vmul.f32 %v1771, 0.7978846
    %v1788 = vmul.f32 %v1776, 0.7978846
    %v1789 = vmul.f32 %v1779, 0.7978846
    %v1790 = vmul.f32 %v1768, %v1768
    %v1791 = vmul.f32 %v1771, %v1771
    %v1792 = vmul.f32 %v1776, %v1776
    %v1793 = vmul.f32 %v1779, %v1779
    %v1794 = vmul.f32 %v1790, 0.044715
    %v1795 = vmul.f32 %v1791, 0.044715
    %v1796 = vmul.f32 %v1792, 0.044715
    %v1797 = vmul.f32 %v1793, 0.044715
    %v1798 = vadd.f32 %v1794, 1.0
    %v1799 = vadd.f32 %v1795, 1.0
    %v1800 = vadd.f32 %v1796, 1.0
    %v1801 = vadd.f32 %v1797, 1.0
    %v1802 = vmul.f32 %v1786, %v1798
    %v1803 = vmul.f32 %v1787, %v1799
    %v1804 = vmul.f32 %v1788, %v1800
    %v1805 = vmul.f32 %v1789, %v1801
    %v1806 = vtanh.pop %v1802
    %v1807 = vtanh.pop %v1803
    %v1808 = vtanh.pop %v1804
    %v1809 = vtanh.pop %v1805
    %v1810 = vadd.f32 %v1806, 1.0
    %v1811 = vadd.f32 %v1807, 1.0
    %v1812 = vadd.f32 %v1808, 1.0
    %v1813 = vadd.f32 %v1809, 1.0
    %v1814 = vmul.f32 %v1782, %v1810
    %v1815 = vmul.f32 %v1783, %v1811
    %v1816 = vmul.f32 %v1784, %v1812
    %v1817 = vmul.f32 %v1785, %v1813
    %vm1818 = vcmask 130048
    %v1819 = vsel %vm1818, %v1814, 0.0
    %1820 = vadd.xlane.f32.xlu0 %v1819
    %v1821 = vpop.xlane.xlu0 %1820
    %v1822 = vsel %vm1818, %v1815, 0.0
    %1823 = vadd.xlane.f32.xlu0 %v1822
    %v1824 = vpop.xlane.xlu0 %1823
    %v1825 = vsel %vm1818, %v1816, 0.0
    %1826 = vadd.xlane.f32.xlu0 %v1825
    %v1827 = vpop.xlane.xlu0 %1826
    %v1828 = vsel %vm1818, %v1817, 0.0
    %1829 = vadd.xlane.f32.xlu0 %v1828
    %v1830 = vpop.xlane.xlu0 %1829
    %v1831 = vrcp.pop 16.0
    %v1832 = vmul.f32 %v1821, %v1831
    %v1833 = vmul.f32 %v1824, %v1831
    %v1834 = vmul.f32 %v1827, %v1831
    %v1835 = vmul.f32 %v1830, %v1831
    %v1836 = vsub.f32 %v1814, %v1832
    %v1837 = vsub.f32 %v1815, %v1833
    %v1838 = vsub.f32 %v1816, %v1834
    %v1839 = vsub.f32 %v1817, %v1835
    %v1840 = vmul.f32 %v1836, %v1836
    %v1841 = vmul.f32 %v1837, %v1837
    %v1842 = vmul.f32 %v1838, %v1838
    %v1843 = vmul.f32 %v1839, %v1839
    %v1844 = vsel %vm1818, %v1840, 0.0
    %1845 = vadd.xlane.f32.xlu0 %v1844
    %v1846 = vpop.xlane.xlu0 %1845
    %v1847 = vsel %vm1818, %v1841, 0.0
    %1848 = vadd.xlane.f32.xlu0 %v1847
    %v1849 = vpop.xlane.xlu0 %1848
    %v1850 = vsel %vm1818, %v1842, 0.0
    %1851 = vadd.xlane.f32.xlu0 %v1850
    %v1852 = vpop.xlane.xlu0 %1851
    %v1853 = vsel %vm1818, %v1843, 0.0
    %1854 = vadd.xlane.f32.xlu0 %v1853
    %v1855 = vpop.xlane.xlu0 %1854
    %v1856 = vmul.f32 %v1846, %v1831
    %v1857 = vmul.f32 %v1849, %v1831
    %v1858 = vmul.f32 %v1852, %v1831
    %v1859 = vmul.f32 %v1855, %v1831
    %v1860 = vadd.f32 %v1856, 1e-05
    %v1861 = vadd.f32 %v1857, 1e-05
    %v1862 = vadd.f32 %v1858, 1e-05
    %v1863 = vadd.f32 %v1859, 1e-05
    %v1864 = vrsqrt.pop %v1860
    %v1865 = vrsqrt.pop %v1861
    %v1866 = vrsqrt.pop %v1862
    %v1867 = vrsqrt.pop %v1863
    %v1868 = vmul.f32 %v1836, %v1864
    %v1869 = vmul.f32 %v1837, %v1865
    %v1870 = vmul.f32 %v1838, %v1866
    %v1871 = vmul.f32 %v1839, %v1867
    %v1872 = vld [vmem:[%s6 + $0x5] sm:$0x1]
    %v1873 = vlaneseq
    %v1874 = vshrl.u32 %v1873, 7
    %v1875 = vsub.s32 0, %v1874
    %v1876 = vrot.slane %v1872, %v1875
    %v1877 = vmul.f32 %v1868, %v1876
    %v1878 = vmul.f32 %v1869, %v1876
    %v1879 = vmul.f32 %v1870, %v1876
    %v1880 = vmul.f32 %v1871, %v1876
    %v1881 = vld [vmem:[%s6 + $0x6] sm:$0x1]
    %v1882 = vlaneseq
    %v1883 = vshrl.u32 %v1882, 7
    %v1884 = vsub.s32 0, %v1883
    %v1885 = vrot.slane %v1881, %v1884
    %v1886 = vadd.f32 %v1877, %v1885
    %v1887 = vadd.f32 %v1878, %v1885
    %v1888 = vadd.f32 %v1879, %v1885
    %v1889 = vadd.f32 %v1880, %v1885
    %v1890 = vpack.c.bf16 %v1887, %v1886
    %v1891 = vpack.c.bf16 %v1889, %v1888
    %v1892 = vld [vmem:[%s3] sm:$0xf]
    %v1893 = vld [vmem:[%s3 + $0x4] sm:$0xf]
    %v1894 = vld [vmem:[%s6 + $0x7] sm:$0x1]
    %v1895 = vlaneseq
    %v1896 = vshrl.u32 %v1895, 7
    %v1897 = vsub.s32 0, %v1896
    %v1898 = vrot.slane %v1894, %v1897
    %v1901 = vunpack.c.l.b16 %v1892
    %v1902 = vunpack.c.l.b16 %v1893
    %v1903 = vpack.c.b16 %v1902, %v1901
    %v1906 = vsel %vm1818, %v1890, 0
    %v1909 = vsel %vm1818, %v1891, 0
    %1911 = vmatprep.subr.bf16.mxu0 0
    %1912 = vmatpush1.bf16.msra.mxu0 0
    %1913 = vmatprep.subr.bf16.mxu0 0
    %1914 = vmatpush1.bf16.msra.mxu0 0
    %1915 = vmatprep.subr.bf16.mxu0 0
    %1916 = vmatpush1.bf16.msra.mxu0 0
    %1917 = vmatprep.subr.bf16.mxu0 0
    %1918 = vmatpush1.bf16.msra.mxu0 0
    %1919 = vmatprep.subr.bf16.mxu0 0
    %1920 = vmatpush1.bf16.msra.mxu0 0
    %1921 = vmatprep.subr.bf16.mxu0 0
    %1922 = vmatpush1.bf16.msra.mxu0 0
    %1923 = vmatprep.subr.bf16.mxu0 0
    %1924 = vmatpush1.bf16.msra.mxu0 0
    %1925 = vmatprep.subr.bf16.mxu0 0
    %1926 = vmatpush1.bf16.msra.mxu0 %v1903
    %1927 = vmatprep.subr.bf16.mxu0 0
    %1928 = vmatpush2.bf16.msra.mxu0 0
    %1929 = vmatprep.subr.bf16.mxu0 0
    %1930 = vmatpush2.bf16.msra.mxu0 0
    %1931 = vmatprep.subr.bf16.mxu0 0
    %1932 = vmatpush2.bf16.msra.mxu0 0
    %1933 = vmatprep.subr.bf16.mxu0 0
    %1934 = vmatpush2.bf16.msra.mxu0 0
    %1935 = vmatprep.subr.bf16.mxu0 0
    %1936 = vmatpush2.bf16.msra.mxu0 0
    %1937 = vmatprep.subr.bf16.mxu0 0
    %1938 = vmatpush2.bf16.msra.mxu0 0
    %1939 = vmatprep.subr.bf16.mxu0 0
    %1940 = vmatpush2.bf16.msra.mxu0 0
    %1941 = vmatprep.subr.bf16.mxu0 0
    %1942 = vmatpush2.bf16.msra.mxu0 0
    %1943 = vmatprep.mubr.bf16.mxu0 0
    %1944 = vmatmul.mubr.bf16.gmra.mxu0 %v1906
    %v1945 = vpop.f32.mrf.mxu0
    %v1946 = vadd.f32 %v1898, %v1945
    %v1947 = vpop.f32.mrf.mxu0
    %v1948 = vpop.f32.mrf.mxu0
    %v1949 = vadd.f32 %v1898, %v1948
    %v1950 = vpop.f32.mrf.mxu0
    %1951 = vmatprep.mubr.bf16.mxu0 0
    %1952 = vmatmul.mubr.bf16.gmra.mxu0 %v1909
    %v1953 = vpop.f32.mrf.mxu0
    %v1954 = vadd.f32 %v1898, %v1953
    %v1955 = vpop.f32.mrf.mxu0
    %v1956 = vpop.f32.mrf.mxu0
    %v1957 = vadd.f32 %v1898, %v1956
    %v1958 = vpop.f32.mrf.mxu0
    %1959 = vdwg.mxu0
    %v1960 = vmul.f32 %v1946, 0.5
    %v1961 = vmul.f32 %v1949, 0.5
    %v1962 = vmul.f32 %v1954, 0.5
    %v1963 = vmul.f32 %v1957, 0.5
    %v1964 = vmul.f32 %v1946, 0.7978846
    %v1965 = vmul.f32 %v1949, 0.7978846
    %v1966 = vmul.f32 %v1954, 0.7978846
    %v1967 = vmul.f32 %v1957, 0.7978846
    %v1968 = vmul.f32 %v1946, %v1946
    %v1969 = vmul.f32 %v1949, %v1949
    %v1970 = vmul.f32 %v1954, %v1954
    %v1971 = vmul.f32 %v1957, %v1957
    %v1972 = vmul.f32 %v1968, 0.044715
    %v1973 = vmul.f32 %v1969, 0.044715
    %v1974 = vmul.f32 %v1970, 0.044715
    %v1975 = vmul.f32 %v1971, 0.044715
    %v1976 = vadd.f32 %v1972, 1.0
    %v1977 = vadd.f32 %v1973, 1.0
    %v1978 = vadd.f32 %v1974, 1.0
    %v1979 = vadd.f32 %v1975, 1.0
    %v1980 = vmul.f32 %v1964, %v1976
    %v1981 = vmul.f32 %v1965, %v1977
    %v1982 = vmul.f32 %v1966, %v1978
    %v1983 = vmul.f32 %v1967, %v1979
    %v1984 = vtanh.pop %v1980
    %v1985 = vtanh.pop %v1981
    %v1986 = vtanh.pop %v1982
    %v1987 = vtanh.pop %v1983
    %v1988 = vadd.f32 %v1984, 1.0
    %v1989 = vadd.f32 %v1985, 1.0
    %v1990 = vadd.f32 %v1986, 1.0
    %v1991 = vadd.f32 %v1987, 1.0
    %v1992 = vmul.f32 %v1960, %v1988
    %v1993 = vmul.f32 %v1961, %v1989
    %v1994 = vmul.f32 %v1962, %v1990
    %v1995 = vmul.f32 %v1963, %v1991
    %vm1996 = vcmask 64512
    %v1997 = vsel %vm1996, %v1992, 0.0
    %1998 = vadd.xlane.f32.xlu0 %v1997
    %v1999 = vpop.xlane.xlu0 %1998
    %v2000 = vsel %vm1996, %v1993, 0.0
    %2001 = vadd.xlane.f32.xlu0 %v2000
    %v2002 = vpop.xlane.xlu0 %2001
    %v2003 = vsel %vm1996, %v1994, 0.0
    %2004 = vadd.xlane.f32.xlu0 %v2003
    %v2005 = vpop.xlane.xlu0 %2004
    %v2006 = vsel %vm1996, %v1995, 0.0
    %2007 = vadd.xlane.f32.xlu0 %v2006
    %v2008 = vpop.xlane.xlu0 %2007
    %v2009 = vrcp.pop 8.0
    %v2010 = vmul.f32 %v1999, %v2009
    %v2011 = vmul.f32 %v2002, %v2009
    %v2012 = vmul.f32 %v2005, %v2009
    %v2013 = vmul.f32 %v2008, %v2009
    %v2014 = vsub.f32 %v1992, %v2010
    %v2015 = vsub.f32 %v1993, %v2011
    %v2016 = vsub.f32 %v1994, %v2012
    %v2017 = vsub.f32 %v1995, %v2013
    %v2018 = vmul.f32 %v2014, %v2014
    %v2019 = vmul.f32 %v2015, %v2015
    %v2020 = vmul.f32 %v2016, %v2016
    %v2021 = vmul.f32 %v2017, %v2017
    %v2022 = vsel %vm1996, %v2018, 0.0
    %2023 = vadd.xlane.f32.xlu0 %v2022
    %v2024 = vpop.xlane.xlu0 %2023
    %v2025 = vsel %vm1996, %v2019, 0.0
    %2026 = vadd.xlane.f32.xlu0 %v2025
    %v2027 = vpop.xlane.xlu0 %2026
    %v2028 = vsel %vm1996, %v2020, 0.0
    %2029 = vadd.xlane.f32.xlu0 %v2028
    %v2030 = vpop.xlane.xlu0 %2029
    %v2031 = vsel %vm1996, %v2021, 0.0
    %2032 = vadd.xlane.f32.xlu0 %v2031
    %v2033 = vpop.xlane.xlu0 %2032
    %v2034 = vmul.f32 %v2024, %v2009
    %v2035 = vmul.f32 %v2027, %v2009
    %v2036 = vmul.f32 %v2030, %v2009
    %v2037 = vmul.f32 %v2033, %v2009
    %v2038 = vadd.f32 %v2034, 1e-05
    %v2039 = vadd.f32 %v2035, 1e-05
    %v2040 = vadd.f32 %v2036, 1e-05
    %v2041 = vadd.f32 %v2037, 1e-05
    %v2042 = vrsqrt.pop %v2038
    %v2043 = vrsqrt.pop %v2039
    %v2044 = vrsqrt.pop %v2040
    %v2045 = vrsqrt.pop %v2041
    %v2046 = vmul.f32 %v2014, %v2042
    %v2047 = vmul.f32 %v2015, %v2043
    %v2048 = vmul.f32 %v2016, %v2044
    %v2049 = vmul.f32 %v2017, %v2045
    %v2050 = vld [vmem:[%s6 + $0x8] sm:$0x1]
    %v2051 = vlaneseq
    %v2052 = vshrl.u32 %v2051, 7
    %v2053 = vsub.s32 0, %v2052
    %v2054 = vrot.slane %v2050, %v2053
    %v2055 = vmul.f32 %v2046, %v2054
    %v2056 = vmul.f32 %v2047, %v2054
    %v2057 = vmul.f32 %v2048, %v2054
    %v2058 = vmul.f32 %v2049, %v2054
    %v2059 = vld [vmem:[%s6 + $0x9] sm:$0x1]
    %v2060 = vlaneseq
    %v2061 = vshrl.u32 %v2060, 7
    %v2062 = vsub.s32 0, %v2061
    %v2063 = vrot.slane %v2059, %v2062
    %v2064 = vadd.f32 %v2055, %v2063
    %v2065 = vadd.f32 %v2056, %v2063
    %v2066 = vadd.f32 %v2057, %v2063
    %v2067 = vadd.f32 %v2058, %v2063
    %v2068 = vpack.c.bf16 %v2065, %v2064
    %v2069 = vpack.c.bf16 %v2067, %v2066
    %v2070 = vld [vmem:[#allocation5] sm:$0xf]
    %v2071 = vld [vmem:[%s6 + $0xa] sm:$0x1]
    %v2072 = vlaneseq
    %v2073 = vshrl.u32 %v2072, 7
    %v2074 = vsub.s32 0, %v2073
    %v2075 = vrot.slane %v2071, %v2074
    %v2077 = vsel %vm1996, %v2068, 0
    %v2080 = vsel %vm1996, %v2069, 0
    %vm2082 = vcmask 1043456
    %v2084 = vsel %vm2082, %v2070, 0
    %2086 = vmatprep.subr.bf16.mxu0 0
    %2087 = vmatpush1.bf16.msra.mxu0 0
    %2088 = vmatprep.subr.bf16.mxu0 0
    %2089 = vmatpush1.bf16.msra.mxu0 0
    %2090 = vmatprep.subr.bf16.mxu0 0
    %2091 = vmatpush1.bf16.msra.mxu0 0
    %2092 = vmatprep.subr.bf16.mxu0 0
    %2093 = vmatpush1.bf16.msra.mxu0 0
    %2094 = vmatprep.subr.bf16.mxu0 0
    %2095 = vmatpush1.bf16.msra.mxu0 0
    %2096 = vmatprep.subr.bf16.mxu0 0
    %2097 = vmatpush1.bf16.msra.mxu0 0
    %2098 = vmatprep.subr.bf16.mxu0 0
    %2099 = vmatpush1.bf16.msra.mxu0 0
    %2100 = vmatprep.subr.bf16.mxu0 0
    %2101 = vmatpush1.bf16.msra.mxu0 %v2084
    %2102 = vmatprep.subr.bf16.mxu0 0
    %2103 = vmatpush2.bf16.msra.mxu0 0
    %2104 = vmatprep.subr.bf16.mxu0 0
    %2105 = vmatpush2.bf16.msra.mxu0 0
    %2106 = vmatprep.subr.bf16.mxu0 0
    %2107 = vmatpush2.bf16.msra.mxu0 0
    %2108 = vmatprep.subr.bf16.mxu0 0
    %2109 = vmatpush2.bf16.msra.mxu0 0
    %2110 = vmatprep.subr.bf16.mxu0 0
    %2111 = vmatpush2.bf16.msra.mxu0 0
    %2112 = vmatprep.subr.bf16.mxu0 0
    %2113 = vmatpush2.bf16.msra.mxu0 0
    %2114 = vmatprep.subr.bf16.mxu0 0
    %2115 = vmatpush2.bf16.msra.mxu0 0
    %2116 = vmatprep.subr.bf16.mxu0 0
    %2117 = vmatpush2.bf16.msra.mxu0 0
    %2118 = vmatprep.mubr.bf16.mxu0 0
    %2119 = vmatmul.mubr.bf16.gmra.mxu0 %v2077
    %v2120 = vpop.f32.mrf.mxu0
    %v2121 = vadd.f32 %v2075, %v2120
    %v2122 = vpop.f32.mrf.mxu0
    %v2123 = vpop.f32.mrf.mxu0
    %v2124 = vadd.f32 %v2075, %v2123
    %v2125 = vpop.f32.mrf.mxu0
    %2126 = vmatprep.mubr.bf16.mxu0 0
    %2127 = vmatmul.mubr.bf16.gmra.mxu0 %v2080
    %v2128 = vpop.f32.mrf.mxu0
    %v2129 = vadd.f32 %v2075, %v2128
    %v2130 = vpop.f32.mrf.mxu0
    %v2131 = vpop.f32.mrf.mxu0
    %v2132 = vadd.f32 %v2075, %v2131
    %v2133 = vpop.f32.mrf.mxu0
    %2134 = vdwg.mxu0
    %v2135 = vld [vmem:[%s5] sm:$0xf]
    %v2136 = vld [vmem:[%s5 + $0x4] sm:$0xf]
    %v2137 = vld [vmem:[%s5 + $0x8] sm:$0xf]
    %v2138 = vld [vmem:[%s5 + $0xc] sm:$0xf]
    %v2139 = vld [vmem:[%s6 + $0xd] sm:$0x1]
    %v2140 = vlaneseq
    %v2141 = vshrl.u32 %v2140, 7
    %v2142 = vsub.s32 0, %v2141
    %v2143 = vrot.slane %v2139, %v2142
    %v2148 = vunpack.c.l.b16 %v2135
    %v2149 = vunpack.c.l.b16 %v2136
    %v2150 = vunpack.c.l.b16 %v2137
    %v2151 = vunpack.c.l.b16 %v2138
    %v2152 = vpack.c.b16 %v2149, %v2148
    %v2153 = vpack.c.b16 %v2151, %v2150
    %2156 = vmatprep.subr.bf16.mxu0 0
    %2157 = vmatpush1.bf16.msra.mxu0 0
    %2158 = vmatprep.subr.bf16.mxu0 0
    %2159 = vmatpush1.bf16.msra.mxu0 0
    %2160 = vmatprep.subr.bf16.mxu0 0
    %2161 = vmatpush1.bf16.msra.mxu0 0
    %2162 = vmatprep.subr.bf16.mxu0 0
    %2163 = vmatpush1.bf16.msra.mxu0 0
    %2164 = vmatprep.subr.bf16.mxu0 0
    %2165 = vmatpush1.bf16.msra.mxu0 0
    %2166 = vmatprep.subr.bf16.mxu0 0
    %2167 = vmatpush1.bf16.msra.mxu0 0
    %2168 = vmatprep.subr.bf16.mxu0 0
    %2169 = vmatpush1.bf16.msra.mxu0 %v2153
    %2170 = vmatprep.subr.bf16.mxu0 0
    %2171 = vmatpush1.bf16.msra.mxu0 %v2152
    %2172 = vmatprep.subr.bf16.mxu0 0
    %2173 = vmatpush2.bf16.msra.mxu0 0
    %2174 = vmatprep.subr.bf16.mxu0 0
    %2175 = vmatpush2.bf16.msra.mxu0 0
    %2176 = vmatprep.subr.bf16.mxu0 0
    %2177 = vmatpush2.bf16.msra.mxu0 0
    %2178 = vmatprep.subr.bf16.mxu0 0
    %2179 = vmatpush2.bf16.msra.mxu0 0
    %2180 = vmatprep.subr.bf16.mxu0 0
    %2181 = vmatpush2.bf16.msra.mxu0 0
    %2182 = vmatprep.subr.bf16.mxu0 0
    %2183 = vmatpush2.bf16.msra.mxu0 0
    %2184 = vmatprep.subr.bf16.mxu0 0
    %2185 = vmatpush2.bf16.msra.mxu0 0
    %2186 = vmatprep.subr.bf16.mxu0 0
    %2187 = vmatpush2.bf16.msra.mxu0 0
    %2188 = vmatprep.mubr.bf16.mxu0 0
    %2189 = vmatmul.mubr.bf16.gmra.mxu0 %v88
    %v2190 = vpop.f32.mrf.mxu0
    %v2191 = vadd.f32 %v2143, %v2190
    %v2192 = vpop.f32.mrf.mxu0
    %v2193 = vpop.f32.mrf.mxu0
    %v2194 = vadd.f32 %v2143, %v2193
    %v2195 = vpop.f32.mrf.mxu0
    %2196 = vmatprep.mubr.bf16.mxu0 0
    %2197 = vmatmul.mubr.bf16.gmra.mxu0 %v91
    %v2198 = vpop.f32.mrf.mxu0
    %v2199 = vadd.f32 %v2143, %v2198
    %v2200 = vpop.f32.mrf.mxu0
    %v2201 = vpop.f32.mrf.mxu0
    %v2202 = vadd.f32 %v2143, %v2201
    %v2203 = vpop.f32.mrf.mxu0
    %2204 = vdwg.mxu0
    %v2205 = vld [vmem:[%s6 + $0xb] sm:$0x1]
    %v2206 = vlaneseq
    %v2207 = vshrl.u32 %v2206, 7
    %v2208 = vsub.s32 0, %v2207
    %v2209 = vrot.slane %v2205, %v2208
    %v2210 = vmul.f32 %v1700, %v2209
    %v2211 = vmul.f32 %v1701, %v2209
    %v2212 = vmul.f32 %v1702, %v2209
    %v2213 = vmul.f32 %v1703, %v2209
    %v2214 = vsel %vm86, %v2210, 0.0
    %2215 = vadd.xlane.f32.xlu0 %v2214
    %v2216 = vpop.xlane.xlu0 %2215
    %v2217 = vsel %vm86, %v2211, 0.0
    %2218 = vadd.xlane.f32.xlu0 %v2217
    %v2219 = vpop.xlane.xlu0 %2218
    %v2220 = vsel %vm86, %v2212, 0.0
    %2221 = vadd.xlane.f32.xlu0 %v2220
    %v2222 = vpop.xlane.xlu0 %2221
    %v2223 = vsel %vm86, %v2213, 0.0
    %2224 = vadd.xlane.f32.xlu0 %v2223
    %v2225 = vpop.xlane.xlu0 %2224
    %v2226 = vld [vmem:[%s6 + $0xc] sm:$0x1]
    %v2227 = vlaneseq
    %v2228 = vshrl.u32 %v2227, 7
    %v2229 = vsub.s32 0, %v2228
    %v2230 = vrot.slane %v2226, %v2229
    %v2231 = vadd.f32 %v2216, %v2230
    %v2232 = vadd.f32 %v2219, %v2230
    %v2233 = vadd.f32 %v2222, %v2230
    %v2234 = vadd.f32 %v2225, %v2230
    %v2235 = vmul.f32 %v2231, 0.5
    %v2236 = vmul.f32 %v2232, 0.5
    %v2237 = vmul.f32 %v2233, 0.5
    %v2238 = vmul.f32 %v2234, 0.5
    %v2239 = vtanh.pop %v2235
    %v2240 = vtanh.pop %v2236
    %v2241 = vtanh.pop %v2237
    %v2242 = vtanh.pop %v2238
    %v2243 = vadd.f32 %v2239, 1.0
    %v2244 = vadd.f32 %v2240, 1.0
    %v2245 = vadd.f32 %v2241, 1.0
    %v2246 = vadd.f32 %v2242, 1.0
    %v2247 = vmul.f32 %v2243, 0.5
    %v2248 = vmul.f32 %v2244, 0.5
    %v2249 = vmul.f32 %v2245, 0.5
    %v2250 = vmul.f32 %v2246, 0.5
    %2252 = vset.pattern.permute.xlu0 0
    %2253 = vperm.xlu0 %2252, %v2247
    %v2254 = vpop.permute.xlu0 %2253
    %2257 = vset.pattern.permute.xlu0 0
    %2258 = vperm.xlu0 %2257, %v2248
    %v2259 = vpop.permute.xlu0 %2258
    %2262 = vset.pattern.permute.xlu0 0
    %2263 = vperm.xlu0 %2262, %v2249
    %v2264 = vpop.permute.xlu0 %2263
    %2267 = vset.pattern.permute.xlu0 0
    %2268 = vperm.xlu0 %2267, %v2250
    %v2269 = vpop.permute.xlu0 %2268
    %v2271 = vmul.f32 %v2254, %v2121
    %v2272 = vmul.f32 %v2259, %v2124
    %v2273 = vmul.f32 %v2264, %v2129
    %v2274 = vmul.f32 %v2269, %v2132
    %v2275 = vsub.f32 1.0, %v2247
    %v2276 = vsub.f32 1.0, %v2248
    %v2277 = vsub.f32 1.0, %v2249
    %v2278 = vsub.f32 1.0, %v2250
    %2280 = vset.pattern.permute.xlu0 0
    %2281 = vperm.xlu0 %2280, %v2275
    %v2282 = vpop.permute.xlu0 %2281
    %2285 = vset.pattern.permute.xlu0 0
    %2286 = vperm.xlu0 %2285, %v2276
    %v2287 = vpop.permute.xlu0 %2286
    %2290 = vset.pattern.permute.xlu0 0
    %2291 = vperm.xlu0 %2290, %v2277
    %v2292 = vpop.permute.xlu0 %2291
    %2295 = vset.pattern.permute.xlu0 0
    %2296 = vperm.xlu0 %2295, %v2278
    %v2297 = vpop.permute.xlu0 %2296
    %v2299 = vmul.f32 %v2282, %v2191
    %v2300 = vmul.f32 %v2287, %v2194
    %v2301 = vmul.f32 %v2292, %v2199
    %v2302 = vmul.f32 %v2297, %v2202
    %v2303 = vadd.f32 %v2271, %v2299
    %v2304 = vadd.f32 %v2272, %v2300
    %v2305 = vadd.f32 %v2273, %v2301
    %v2306 = vadd.f32 %v2274, %v2302
    %2307 = vst.msk [vmem:[%s7] sm:$0xff] %vm1996, %v2303
    %2308 = vst.msk [vmem:[%s7 + $0x8] sm:$0xff] %vm1996, %v2304
    %2309 = vst.msk [vmem:[%s7 + $0x10] sm:$0xff] %vm1996, %v2305
    %2310 = vst.msk [vmem:[%s7 + $0x18] sm:$0xff] %vm1996, %v2306
    // Predicated region
    $region38: #{tpu_custom_call.1} parent=1 // pred_check
      _
    $region39: #{tpu_custom_call.1} parent=1 // pred_check_branch
      %2312 = sbr.rel (0) target = $region41
    $region40: #{tpu_custom_call.1} parent=1 // pred_region
      _
    $region41: #{tpu_custom_call.1} parent=1 // pred_fallthru
      _
    // Predicated region
    $region42: #{tpu_custom_call.1} parent=1 // pred_check
      _
    $region43: #{tpu_custom_call.1} parent=1 // pred_check_branch
      %2314 = sbr.rel (0) target = $region45
    $region44: #{tpu_custom_call.1} parent=1 // pred_region
      _
    $region45: #{tpu_custom_call.1} parent=1 // pred_fallthru
      _
    %2315 = vsyncpa [#allocation4], 1
    %2316 = vsyncpa [#allocation6], 1

</llo_original>
